<compile_context>
chip_gen: v7x
topology: tpu7x:2x2x1
jax: 0.10.0
libtpu: 0.0.40
codegen_flags: <defaults>
</compile_context>

<pallas_src>
import jax
import jax.numpy as jnp
from jax import lax
from jax.experimental import pallas as pl
from jax.experimental.pallas import tpu as pltpu

FACE_EMBEDDING_SIZE = 128
BN_EPS = 1e-5


# ---------------------------------------------------------------------------
# Kernel 1: conv(3x3) + folded BN + ReLU + MaxPool(2,2) via 4 im2col streams.
# ---------------------------------------------------------------------------
def _backbone_kernel(p_ref, w_ref, shift_ref, o_ref):
    # p_ref:     (1, 4, T, Kp)  bf16 im2col patches, one stream per 2x2-pool slot
    # w_ref:     (Kp, Cout)     bf16 conv weights with BN scale folded in
    # shift_ref: (1, Cout)      f32 folded conv-bias + BN shift
    # o_ref:     (1, T, Cout)   bf16 pooled activations (T = th * Wp pooled pixels)
    w = w_ref[...]
    shift = shift_ref[...]

    def conv_bn_relu(g):
        y = jnp.dot(p_ref[0, g], w, preferred_element_type=jnp.float32)
        return jnp.maximum(y + shift, 0.0)

    # MaxPool2d(2,2): elementwise max of the 4 post-ReLU streams.
    pooled = jnp.maximum(jnp.maximum(conv_bn_relu(0), conv_bn_relu(1)),
                         jnp.maximum(conv_bn_relu(2), conv_bn_relu(3)))
    # Cout=64 lanes -> masked stores; accepted to avoid an in-kernel relayout.
    o_ref[0] = pooled.astype(o_ref.dtype)


# ---------------------------------------------------------------------------
# Kernel 2: Linear(F -> E) as a K-tiled reduction + L2 normalize (dim=1).
# ---------------------------------------------------------------------------
def _fc_normalize_kernel(x_ref, w_ref, b_ref, o_ref, acc_ref):
    # x_ref: (B, tk) bf16   w_ref: (tk, E) bf16   b_ref: (1, E) f32
    # o_ref: (B, E) f32     acc_ref: (B, E) f32 scratch accumulator
    k = pl.program_id(0)

    @pl.when(k == 0)
    def _init():
        acc_ref[...] = jnp.zeros_like(acc_ref)

    acc_ref[...] += jnp.dot(x_ref[...], w_ref[...],
                            preferred_element_type=jnp.float32)

    @pl.when(k == pl.num_programs(0) - 1)
    def _finalize():
        y = acc_ref[...] + b_ref[...]
        ss = jnp.sum(y * y, axis=1, keepdims=True)
        o_ref[...] = (y * lax.rsqrt(jnp.maximum(ss, 1e-24))).astype(o_ref.dtype)


# ---------------------------------------------------------------------------
# Tile pickers
# ---------------------------------------------------------------------------
def _pick_row_tile(hp, wp, cap_rows=512):
    """Largest th dividing hp with th*wp <= cap_rows and (th*wp) % 8 == 0,
    keeping >= 2 row-tiles per image when possible (feeds both v7x TCs)."""
    limit = max(1, hp // 2)
    best = None
    for th in range(1, limit + 1):
        if hp % th == 0 and (th * wp) % 8 == 0 and th * wp <= cap_rows:
            best = th
    return best if best is not None else hp  # fall back: one full-image tile


def _pick_k_tile(f):
    """Largest multiple of 128 dividing F, capped at 4096 (VMEM budget) and
    at F//2 so the reduction grid has >= 2 steps."""
    cap = min(4096, f // 2) if f >= 256 else f
    best = None
    t = 128
    while t <= cap:
        if f % t == 0:
            best = t
        t += 128
    return best if best is not None else f


# ---------------------------------------------------------------------------
# One-time parameter preparation (BN folding, layout permutation, bf16 cast)
# ---------------------------------------------------------------------------
def prepare_params(params, cin, h, w):
    cout = params["conv_w"].shape[-1]
    emb = params["fc_w"].shape[-1]
    hp, wp = h // 2, w // 2

    scale = params["bn_gamma"] / jnp.sqrt(params["bn_var"] + BN_EPS)
    shift = params["bn_beta"] + (params["conv_b"] - params["bn_mean"]) * scale

    kc = 9 * cin
    kp = ((kc + 31) // 32) * 32
    w27 = params["conv_w"].reshape(kc, cout) * scale[None, :]   # fold BN scale
    w27 = jnp.pad(w27, ((0, kp - kc), (0, 0))).astype(jnp.bfloat16)

    # torch flattens NCHW -> fc_w rows are in (c, hp, wp) order; the kernels
    # produce features in (hp, wp, c) order, so permute the rows once here.
    fcw = params["fc_w"].reshape(cout, hp, wp, emb)
    fcw = jnp.transpose(fcw, (1, 2, 0, 3)).reshape(hp * wp * cout, emb)

    return {
        "w27": w27,
        "shift": shift.reshape(1, cout).astype(jnp.float32),
        "fc_w": fcw.astype(jnp.bfloat16),
        "fc_b": params["fc_b"].reshape(1, emb).astype(jnp.float32),
    }


# ---------------------------------------------------------------------------
# Forward
# ---------------------------------------------------------------------------
def arcface_forward(x_nchw, kparams):
    B, Cin, H, W = x_nchw.shape
    Hp, Wp = H // 2, W // 2
    Kp, Cout = kparams["w27"].shape
    F, E = kparams["fc_w"].shape
    Kc = 9 * Cin

    # ---- im2col into 4 lane-dense pool-window streams (XLA layout prep) ----
    x = jnp.transpose(x_nchw, (0, 2, 3, 1)).astype(jnp.float32)     # NCHW -> NHWC
    x_pad = jnp.pad(x, ((0, 0), (1, 1), (1, 1), (0, 0)))            # conv padding=1
    pats = jnp.concatenate(
        [x_pad[:, ky:ky + H, kx:kx + W, :] for ky in range(3) for kx in range(3)],
        axis=-1)                                                     # (B, H, W, 9*Cin)
    streams = jnp.stack(
        [pats[:, dy::2, dx::2, :] for dy in (0, 1) for dx in (0, 1)],
        axis=1)                                                      # (B, 4, Hp, Wp, Kc)
    patches = streams.reshape(B, 4, Hp * Wp, Kc)
    patches = jnp.pad(patches, ((0, 0), (0, 0), (0, 0), (0, Kp - Kc)))
    patches = patches.astype(jnp.bfloat16)

    # ---- kernel 1: backbone, tiled over (batch, pooled-row tiles) ----
    th = _pick_row_tile(Hp, Wp)
    T = th * Wp
    pooled = pl.pallas_call(
        _backbone_kernel,
        out_shape=jax.ShapeDtypeStruct((B, Hp * Wp, Cout), jnp.bfloat16),
        grid_spec=pltpu.PrefetchScalarGridSpec(
            num_scalar_prefetch=0,
            grid=(B, Hp // th),
            in_specs=[
                pl.BlockSpec((1, 4, T, Kp), lambda b, t: (b, 0, t, 0)),
                pl.BlockSpec((Kp, Cout), lambda b, t: (0, 0)),
                pl.BlockSpec((1, Cout), lambda b, t: (0, 0)),
            ],
            out_specs=pl.BlockSpec((1, T, Cout), lambda b, t: (b, t, 0)),
        ),
        compiler_params=pltpu.CompilerParams(
            dimension_semantics=("parallel", "parallel"),
            vmem_limit_bytes=32 * 1024 * 1024),
    )(patches, kparams["w27"], kparams["shift"])

    # Features are already in fc row order: flatten is free (no transpose).
    feat = pooled.reshape(B, F)

    # ---- kernel 2: fc as K-tiled reduction + L2 normalize ----
    tk = _pick_k_tile(F)
    emb = pl.pallas_call(
        _fc_normalize_kernel,
        out_shape=jax.ShapeDtypeStruct((B, E), jnp.float32),
        grid_spec=pltpu.PrefetchScalarGridSpec(
            num_scalar_prefetch=0,
            grid=(F // tk,),
            in_specs=[
                pl.BlockSpec((B, tk), lambda k: (0, k)),
                pl.BlockSpec((tk, E), lambda k: (k, 0)),
                pl.BlockSpec((1, E), lambda k: (0, 0)),
            ],
            out_specs=pl.BlockSpec((B, E), lambda k: (0, 0)),
            scratch_shapes=[pltpu.VMEM((B, E), jnp.float32)],
        ),
        compiler_params=pltpu.CompilerParams(
            dimension_semantics=("arbitrary",),
            vmem_limit_bytes=32 * 1024 * 1024),
    )(feat, kparams["fc_w"], kparams["fc_b"])
    return emb


# ---------------------------------------------------------------------------
# Pure-JAX f32 reference (mirrors the PyTorch module, inference-mode BN)
# ---------------------------------------------------------------------------
def reference_forward(x_nchw, params):
    x = jnp.transpose(x_nchw, (0, 2, 3, 1))
    y = lax.conv_general_dilated(
        x, params["conv_w"], window_strides=(1, 1), padding="SAME",
        dimension_numbers=("NHWC", "HWIO", "NHWC"))
    y = y + params["conv_b"]
    y = (y - params["bn_mean"]) / jnp.sqrt(params["bn_var"] + BN_EPS)
    y = y * params["bn_gamma"] + params["bn_beta"]
    y = jnp.maximum(y, 0.0)
    B, H, W, C = y.shape
    y = y.reshape(B, H // 2, 2, W // 2, 2, C).max(axis=(2, 4))
    feat = jnp.transpose(y, (0, 3, 1, 2)).reshape(B, -1)   # torch NCHW flatten
    z = feat @ params["fc_w"] + params["fc_b"]
    n = jnp.sqrt(jnp.sum(z * z, axis=1, keepdims=True))
    return z / jnp.maximum(n, 1e-12)


def init_params(key, cin, cout, h, w, emb):
    f = cout * (h // 2) * (w // 2)
    k = jax.random.split(key, 8)
    return {
        "conv_w": 0.1 * jax.random.normal(k[0], (3, 3, cin, cout), jnp.float32),
        "conv_b": 0.1 * jax.random.normal(k[1], (cout,), jnp.float32),
        "bn_gamma": 1.0 + 0.1 * jax.random.normal(k[2], (cout,), jnp.float32),
        "bn_beta": 0.1 * jax.random.normal(k[3], (cout,), jnp.float32),
        "bn_mean": 0.1 * jax.random.normal(k[4], (cout,), jnp.float32),
        "bn_var": jax.random.uniform(k[5], (cout,), jnp.float32, 0.5, 1.5),
        "fc_w": 0.02 * jax.random.normal(k[6], (f, emb), jnp.float32),
        "fc_b": 0.02 * jax.random.normal(k[7], (emb,), jnp.float32),
    }


if __name__ == "__main__":
    # Small shapes consistent with the module: NCHW input, 3 channels, 64 conv
    # channels, fc sized for the pooled feature map (real model: 224x224).
    B, Cin, H, W = 2, 3, 16, 16
    Cout, E = 64, FACE_EMBEDDING_SIZE

    key = jax.random.PRNGKey(0)
    kx, kpm = jax.random.split(key)
    x = jax.random.normal(kx, (B, Cin, H, W), jnp.float32)
    params = init_params(kpm, Cin, Cout, H, W, E)

    kparams = prepare_params(params, Cin, H, W)          # one-time weight prep
    fwd = jax.jit(arcface_forward)
    out = jax.block_until_ready(fwd(x, kparams))

    ref = jax.block_until_ready(reference_forward(x, params))
    assert out.shape == (B, E)
    assert jnp.allclose(out, ref, atol=5e-3, rtol=1e-2), (
        "mismatch vs reference: max |diff| = "
        f"{float(jnp.max(jnp.abs(out - ref))):.3e}")
    assert jnp.allclose(jnp.linalg.norm(out, axis=1), 1.0, atol=1e-3)

    print("KERNEL_OK")
</pallas_src>

<mosaic_0001>
module attributes {stable_mosaic.version = 11 : i64} {
  func.func @_backbone_kernel(%arg0: i32, %arg1: i32, %arg2: memref<1x4x32x32xbf16, #tpu.memory_space<vmem>>, %arg3: memref<32x64xbf16, #tpu.memory_space<vmem>>, %arg4: memref<1x64xf32, #tpu.memory_space<vmem>>, %arg5: memref<1x32x64xbf16, #tpu.memory_space<vmem>>) attributes {dimension_semantics = [#tpu.dimension_semantics<parallel>, #tpu.dimension_semantics<parallel>], iteration_bounds = array<i64: 2, 2>, scalar_prefetch = 0 : i64, scratch_operands = 0 : i64, tpu.core_type = #tpu.core_type<tc>, window_params = [{transform_indices = @transform_0, window_bounds = array<i64: 1, 4, 32, 32>}, {pipeline_mode = #tpu.pipeline_mode<synchronous>, transform_indices = @transform_1, window_bounds = array<i64: 32, 64>}, {pipeline_mode = #tpu.pipeline_mode<synchronous>, transform_indices = @transform_2, window_bounds = array<i64: 1, 64>}, {transform_indices = @transform_3, window_bounds = array<i64: 1, 32, 64>}]} {
    %c0 = arith.constant 0 : index
    %c0_0 = arith.constant 0 : index
    %0 = vector.load %arg3[%c0, %c0_0] : memref<32x64xbf16, #tpu.memory_space<vmem>>, vector<32x64xbf16>
    %c0_1 = arith.constant 0 : index
    %c0_2 = arith.constant 0 : index
    %1 = vector.load %arg4[%c0_1, %c0_2] : memref<1x64xf32, #tpu.memory_space<vmem>>, vector<1x64xf32>
    %c0_3 = arith.constant 0 : index
    %c0_4 = arith.constant 0 : index
    %c0_5 = arith.constant 0 : index
    %c0_6 = arith.constant 0 : index
    %2 = vector.load %arg2[%c0_3, %c0_4, %c0_5, %c0_6] : memref<1x4x32x32xbf16, #tpu.memory_space<vmem>>, vector<1x1x32x32xbf16>
    %3 = vector.shape_cast %2 : vector<1x1x32x32xbf16> to vector<32x32xbf16>
    %cst = arith.constant dense<0.000000e+00> : vector<32x64xf32>
    %4 = tpu.matmul %3, %0, %cst {dimension_numbers = #tpu.dot_dimension_numbers<[1], [0], [0], [1], [0, 0, 1, 1], [], []>} : vector<32x32xbf16>, vector<32x64xbf16>, vector<32x64xf32> -> vector<32x64xf32>
    %5 = vector.broadcast %1 : vector<1x64xf32> to vector<32x64xf32>
    %6 = arith.addf %4, %5 : vector<32x64xf32>
    %cst_7 = arith.constant 0.000000e+00 : f32
    %7 = vector.broadcast %cst_7 : f32 to vector<32x64xf32>
    %8 = arith.maximumf %6, %7 : vector<32x64xf32>
    %c0_8 = arith.constant 0 : index
    %c1 = arith.constant 1 : index
    %c0_9 = arith.constant 0 : index
    %c0_10 = arith.constant 0 : index
    %9 = vector.load %arg2[%c0_8, %c1, %c0_9, %c0_10] : memref<1x4x32x32xbf16, #tpu.memory_space<vmem>>, vector<1x1x32x32xbf16>
    %10 = vector.shape_cast %9 : vector<1x1x32x32xbf16> to vector<32x32xbf16>
    %cst_11 = arith.constant dense<0.000000e+00> : vector<32x64xf32>
    %11 = tpu.matmul %10, %0, %cst_11 {dimension_numbers = #tpu.dot_dimension_numbers<[1], [0], [0], [1], [0, 0, 1, 1], [], []>} : vector<32x32xbf16>, vector<32x64xbf16>, vector<32x64xf32> -> vector<32x64xf32>
    %12 = vector.broadcast %1 : vector<1x64xf32> to vector<32x64xf32>
    %13 = arith.addf %11, %12 : vector<32x64xf32>
    %cst_12 = arith.constant 0.000000e+00 : f32
    %14 = vector.broadcast %cst_12 : f32 to vector<32x64xf32>
    %15 = arith.maximumf %13, %14 : vector<32x64xf32>
    %16 = arith.maximumf %8, %15 : vector<32x64xf32>
    %c0_13 = arith.constant 0 : index
    %c2 = arith.constant 2 : index
    %c0_14 = arith.constant 0 : index
    %c0_15 = arith.constant 0 : index
    %17 = vector.load %arg2[%c0_13, %c2, %c0_14, %c0_15] : memref<1x4x32x32xbf16, #tpu.memory_space<vmem>>, vector<1x1x32x32xbf16>
    %18 = vector.shape_cast %17 : vector<1x1x32x32xbf16> to vector<32x32xbf16>
    %cst_16 = arith.constant dense<0.000000e+00> : vector<32x64xf32>
    %19 = tpu.matmul %18, %0, %cst_16 {dimension_numbers = #tpu.dot_dimension_numbers<[1], [0], [0], [1], [0, 0, 1, 1], [], []>} : vector<32x32xbf16>, vector<32x64xbf16>, vector<32x64xf32> -> vector<32x64xf32>
    %20 = vector.broadcast %1 : vector<1x64xf32> to vector<32x64xf32>
    %21 = arith.addf %19, %20 : vector<32x64xf32>
    %cst_17 = arith.constant 0.000000e+00 : f32
    %22 = vector.broadcast %cst_17 : f32 to vector<32x64xf32>
    %23 = arith.maximumf %21, %22 : vector<32x64xf32>
    %c0_18 = arith.constant 0 : index
    %c3 = arith.constant 3 : index
    %c0_19 = arith.constant 0 : index
    %c0_20 = arith.constant 0 : index
    %24 = vector.load %arg2[%c0_18, %c3, %c0_19, %c0_20] : memref<1x4x32x32xbf16, #tpu.memory_space<vmem>>, vector<1x1x32x32xbf16>
    %25 = vector.shape_cast %24 : vector<1x1x32x32xbf16> to vector<32x32xbf16>
    %cst_21 = arith.constant dense<0.000000e+00> : vector<32x64xf32>
    %26 = tpu.matmul %25, %0, %cst_21 {dimension_numbers = #tpu.dot_dimension_numbers<[1], [0], [0], [1], [0, 0, 1, 1], [], []>} : vector<32x32xbf16>, vector<32x64xbf16>, vector<32x64xf32> -> vector<32x64xf32>
    %27 = vector.broadcast %1 : vector<1x64xf32> to vector<32x64xf32>
    %28 = arith.addf %26, %27 : vector<32x64xf32>
    %cst_22 = arith.constant 0.000000e+00 : f32
    %29 = vector.broadcast %cst_22 : f32 to vector<32x64xf32>
    %30 = arith.maximumf %28, %29 : vector<32x64xf32>
    %31 = arith.maximumf %23, %30 : vector<32x64xf32>
    %32 = arith.maximumf %16, %31 : vector<32x64xf32>
    %33 = arith.truncf %32 : vector<32x64xf32> to vector<32x64xbf16>
    %c0_23 = arith.constant 0 : index
    %c0_24 = arith.constant 0 : index
    %c0_25 = arith.constant 0 : index
    %34 = vector.load %arg5[%c0_23, %c0_24, %c0_25] : memref<1x32x64xbf16, #tpu.memory_space<vmem>>, vector<1x32x64xbf16>
    %35 = vector.shape_cast %34 : vector<1x32x64xbf16> to vector<32x64xbf16>
    %36 = vector.shape_cast %33 : vector<32x64xbf16> to vector<1x32x64xbf16>
    tpu.vector_store %arg5[%c0_23, %c0_24, %c0_25], %36 {strides = array<i32>} : memref<1x32x64xbf16, #tpu.memory_space<vmem>>, vector<1x32x64xbf16>,
    return
  }
  func.func @transform_0(%arg0: i32, %arg1: i32) -> (i32, i32, i32, i32) {
    %c0_i32 = arith.constant 0 : i32
    %c0_i32_0 = arith.constant 0 : i32
    %c0_i32_1 = arith.constant 0 : i32
    return %arg0, %c0_i32, %arg1, %c0_i32_0 : i32, i32, i32, i32
  }
  func.func @transform_1(%arg0: i32, %arg1: i32) -> (i32, i32) {
    %c0_i32 = arith.constant 0 : i32
    %c0_i32_0 = arith.constant 0 : i32
    %c0_i32_1 = arith.constant 0 : i32
    return %c0_i32, %c0_i32_0 : i32, i32
  }
  func.func @transform_2(%arg0: i32, %arg1: i32) -> (i32, i32) {
    %c0_i32 = arith.constant 0 : i32
    %c0_i32_0 = arith.constant 0 : i32
    %c0_i32_1 = arith.constant 0 : i32
    return %c0_i32, %c0_i32_0 : i32, i32
  }
  func.func @transform_3(%arg0: i32, %arg1: i32) -> (i32, i32, i32) {
    %c0_i32 = arith.constant 0 : i32
    %c0_i32_0 = arith.constant 0 : i32
    return %arg0, %arg1, %c0_i32 : i32, i32, i32
  }
}

module attributes {stable_mosaic.version = 11 : i64} {
  func.func @_fc_normalize_kernel(%arg0: i32, %arg1: memref<2x2048xbf16, #tpu.memory_space<vmem>>, %arg2: memref<2048x128xbf16, #tpu.memory_space<vmem>>, %arg3: memref<1x128xf32, #tpu.memory_space<vmem>>, %arg4: memref<2x128xf32, #tpu.memory_space<vmem>>, %arg5: memref<2x128xf32, #tpu.memory_space<vmem>>) attributes {dimension_semantics = [#tpu.dimension_semantics<arbitrary>], iteration_bounds = array<i64: 2>, scalar_prefetch = 0 : i64, scratch_operands = 1 : i64, tpu.core_type = #tpu.core_type<tc>, window_params = [{transform_indices = @transform_0, window_bounds = array<i64: 2, 2048>}, {transform_indices = @transform_1, window_bounds = array<i64: 2048, 128>}, {pipeline_mode = #tpu.pipeline_mode<synchronous>, transform_indices = @transform_2, window_bounds = array<i64: 1, 128>}, {pipeline_mode = #tpu.pipeline_mode<synchronous>, transform_indices = @transform_3, window_bounds = array<i64: 2, 128>}]} {
    %c0_i32 = arith.constant 0 : i32
    %0 = arith.cmpi eq, %arg0, %c0_i32 : i32
    %1 = arith.extui %0 : i1 to i32
    %c0_i32_0 = arith.constant 0 : i32
    %2 = arith.cmpi ne, %1, %c0_i32_0 : i32
    scf.if %2 {
      %cst_9 = arith.constant 0.000000e+00 : f32
      %12 = vector.broadcast %cst_9 : f32 to vector<2x128xf32>
      %c0_10 = arith.constant 0 : index
      %c0_11 = arith.constant 0 : index
      %13 = vector.load %arg5[%c0_10, %c0_11] : memref<2x128xf32, #tpu.memory_space<vmem>>, vector<2x128xf32>
      tpu.vector_store %arg5[%c0_10, %c0_11], %12 {strides = array<i32>} : memref<2x128xf32, #tpu.memory_space<vmem>>, vector<2x128xf32>,
    } else {
    }
    %c0 = arith.constant 0 : index
    %c0_1 = arith.constant 0 : index
    %3 = vector.load %arg5[%c0, %c0_1] : memref<2x128xf32, #tpu.memory_space<vmem>>, vector<2x128xf32>
    %c0_2 = arith.constant 0 : index
    %c0_3 = arith.constant 0 : index
    %4 = vector.load %arg1[%c0_2, %c0_3] : memref<2x2048xbf16, #tpu.memory_space<vmem>>, vector<2x2048xbf16>
    %c0_4 = arith.constant 0 : index
    %c0_5 = arith.constant 0 : index
    %5 = vector.load %arg2[%c0_4, %c0_5] : memref<2048x128xbf16, #tpu.memory_space<vmem>>, vector<2048x128xbf16>
    %cst = arith.constant dense<0.000000e+00> : vector<2x128xf32>
    %6 = tpu.matmul %4, %5, %cst {dimension_numbers = #tpu.dot_dimension_numbers<[1], [0], [0], [1], [0, 0, 1, 1], [], []>} : vector<2x2048xbf16>, vector<2048x128xbf16>, vector<2x128xf32> -> vector<2x128xf32>
    %7 = arith.addf %3, %6 : vector<2x128xf32>
    %c0_6 = arith.constant 0 : index
    %c0_7 = arith.constant 0 : index
    %8 = vector.load %arg5[%c0_6, %c0_7] : memref<2x128xf32, #tpu.memory_space<vmem>>, vector<2x128xf32>
    tpu.vector_store %arg5[%c0_6, %c0_7], %7 {strides = array<i32>} : memref<2x128xf32, #tpu.memory_space<vmem>>, vector<2x128xf32>,
    %c1_i32 = arith.constant 1 : i32
    %9 = arith.cmpi eq, %arg0, %c1_i32 : i32
    %10 = arith.extui %9 : i1 to i32
    %c0_i32_8 = arith.constant 0 : i32
    %11 = arith.cmpi ne, %10, %c0_i32_8 : i32
    scf.if %11 {
      %c0_9 = arith.constant 0 : index
      %c0_10 = arith.constant 0 : index
      %12 = vector.load %arg5[%c0_9, %c0_10] : memref<2x128xf32, #tpu.memory_space<vmem>>, vector<2x128xf32>
      %c0_11 = arith.constant 0 : index
      %c0_12 = arith.constant 0 : index
      %13 = vector.load %arg3[%c0_11, %c0_12] : memref<1x128xf32, #tpu.memory_space<vmem>>, vector<1x128xf32>
      %14 = vector.broadcast %13 : vector<1x128xf32> to vector<2x128xf32>
      %15 = arith.addf %12, %14 : vector<2x128xf32>
      %16 = arith.mulf %15, %15 : vector<2x128xf32>
      %cst_13 = arith.constant dense<0.000000e+00> : vector<2xf32>
      %17 = vector.multi_reduction <add>, %16, %cst_13 [1] : vector<2x128xf32> to vector<2xf32>
      %18 = vector.shape_cast %17 : vector<2xf32> to vector<2x1xf32>
      %cst_14 = arith.constant 1.000000e-24 : f32
      %19 = vector.broadcast %cst_14 : f32 to vector<2x1xf32>
      %20 = arith.maximumf %18, %19 : vector<2x1xf32>
      %21 = math.rsqrt %20 : vector<2x1xf32>
      %22 = vector.broadcast %21 : vector<2x1xf32> to vector<2x128xf32>
      %23 = arith.mulf %15, %22 : vector<2x128xf32>
      %c0_15 = arith.constant 0 : index
      %c0_16 = arith.constant 0 : index
      %24 = vector.load %arg4[%c0_15, %c0_16] : memref<2x128xf32, #tpu.memory_space<vmem>>, vector<2x128xf32>
      tpu.vector_store %arg4[%c0_15, %c0_16], %23 {strides = array<i32>} : memref<2x128xf32, #tpu.memory_space<vmem>>, vector<2x128xf32>,
    } else {
    }
    return
  }
  func.func @transform_0(%arg0: i32) -> (i32, i32) {
    %c0_i32 = arith.constant 0 : i32
    %c0_i32_0 = arith.constant 0 : i32
    return %c0_i32, %arg0 : i32, i32
  }
  func.func @transform_1(%arg0: i32) -> (i32, i32) {
    %c0_i32 = arith.constant 0 : i32
    %c0_i32_0 = arith.constant 0 : i32
    return %arg0, %c0_i32 : i32, i32
  }
  func.func @transform_2(%arg0: i32) -> (i32, i32) {
    %c0_i32 = arith.constant 0 : i32
    %c0_i32_0 = arith.constant 0 : i32
    %c0_i32_1 = arith.constant 0 : i32
    return %c0_i32, %c0_i32_0 : i32, i32
  }
  func.func @transform_3(%arg0: i32) -> (i32, i32) {
    %c0_i32 = arith.constant 0 : i32
    %c0_i32_0 = arith.constant 0 : i32
    %c0_i32_1 = arith.constant 0 : i32
    return %c0_i32, %c0_i32_0 : i32, i32
  }
}

</mosaic_0001>

<llo_original>
// kernel: arcface_forward.2
$region0: #{arcface_forward.2}
  #allocation0 [shape = 'u32[]', space=smem, size = 0x4, offset = 0x4, fixed_abs, tag = 'smem constant byte address 0x4 - core index']
  #allocation1 [shape = 'u32[144,128]{1,0:T(1,128)}', space=vmem, size = 0x12000, scoped, tag = 'internal scratch']
  %s0 = inlined_call_operand.vmem [shape: bf16[2,4,64,32], index: 0, kind: input, shape index: {}]
  %s1 = inlined_call_operand.vmem [shape: bf16[32,64], index: 1, kind: input, shape index: {}]
  %s2 = inlined_call_operand.vmem [shape: f32[1,64], index: 2, kind: input, shape index: {}]
  %s3 = inlined_call_operand.vmem [shape: bf16[2,64,64], index: 3, kind: output, shape index: {}]
  %s4 = sld [smem:[#allocation0]]
  $region86: #{arcface_forward.2} parent=0
    _
  %s6 = ssub.s32 1, %s4
  %s7 = scalar_select 0, %s6, %s4
  $region1: #{arcface_forward.2} parent=0
    #allocation2 [shape = 'u8[65536]{0}', space=vmem, size = 0x10000, scoped, tag = 'input window, operand 0']
    loop: start=0, step=1, limit=6
    $region2: #{arcface_forward.2} parent=1 // loop_pre_header
      _
    $region3: #{arcface_forward.2} parent=1 // loop_header
      %s9 = sphi 0, %s13
      %p10 = scmp.ge.s32.totalorder %s9, 6
      %s16 = sphi 0, %s28
      %s17 = sphi 0, %s24
      %s18 = sphi 0, %s16
      %s19 = sphi 0, %s17
      %s20 = sphi 0, %s18
      %s21 = sphi 0, %s19
      %s33 = sphi 0, %s35
      %s36 = sphi 0, %s33
      %s37 = sphi 0, %s36
      %s53 = sphi 0, %s37
      %s57 = sphi 0, %s57
      %s59 = sphi 0, %s57
      %s60 = sphi 0, %s59
      %s74 = sphi 0, %s60
      %s78 = sphi 0, %s78
      %s80 = sphi 0, %s78
      %s81 = sphi 0, %s80
      %s95 = sphi 0, %s81
      %s103 = sphi 0, %s105
      %s106 = sphi 0, %s103
      %s107 = sphi 0, %s106
      %s123 = sphi 0, %s107
    $region4: #{arcface_forward.2} parent=1 // loop_header_branch
      %12 = sbr.rel (%p10) target = $region8
    $region5: #{arcface_forward.2} parent=1 // loop_body
      %s14 = ssub.s32 %s9, 1
      %s15 = ssub.s32 %s9, 2
      %s22 = sadd.s32 1, %s17
      %p23 = scmp.ge.s32.totalorder %s22, 2
      %s24 = scalar_select %p23, 0, %s22
      %s25 = sadd.s32 1, %s16
      %s26 = scalar_select %p23, %s25, %s16
      %p27 = scmp.ge.s32.totalorder %s26, 2
      %s28 = scalar_select %p27, 0, %s26
      %s29 = ssub.s32 %s16, %s28
      %s30 = ssub.s32 %s17, %s24
      %s31 = sor.u32 %s29, %s30
      %p32 = scmp.eq.s32.totalorder %s31, 0
      %s34 = sadd.s32 %s33, 1
      %s35 = scalar_select %p32, %s33, %s34
      %p38 = pneg %p32
      %p39 = scmp.eq.s32.totalorder %s9, 3
      %p40 = por %p38, %p39
      %p41 = scmp.ne.s32.totalorder %s33, %s36
      %p42 = scmp.eq.s32.totalorder %s9, 0
      %p43 = por %p41, %p42
      %p44 = scmp.ne.s32.totalorder %s33, %s36
      %p45 = scmp.eq.s32.totalorder %s14, 3
      %p46 = por %p44, %p45
      %p47 = scmp.ne.s32.totalorder %s36, %s37
      %p48 = scmp.eq.s32.totalorder %s14, 0
      %p49 = por %p47, %p48
      %p50 = scmp.ne.s32.totalorder %s36, %s37
      %p51 = scmp.eq.s32.totalorder %s15, 3
      %p52 = por %p50, %p51
      %p54 = scmp.ne.s32.totalorder %s37, %s53
      %p55 = scmp.eq.s32.totalorder %s15, 0
      %p56 = por %p54, %p55
      %s58 = sadd.s32 %s57, 1
      %p61 = scmp.eq.s32.totalorder %s9, 3
      %p62 = scmp.ne.s32.totalorder %s57, %s59
      %p63 = scmp.eq.s32.totalorder %s9, 0
      %p64 = por %p62, %p63
      %p65 = scmp.ne.s32.totalorder %s57, %s59
      %p66 = scmp.eq.s32.totalorder %s14, 3
      %p67 = por %p65, %p66
      %p68 = scmp.ne.s32.totalorder %s59, %s60
      %p69 = scmp.eq.s32.totalorder %s14, 0
      %p70 = por %p68, %p69
      %p71 = scmp.ne.s32.totalorder %s59, %s60
      %p72 = scmp.eq.s32.totalorder %s15, 3
      %p73 = por %p71, %p72
      %p75 = scmp.ne.s32.totalorder %s60, %s74
      %p76 = scmp.eq.s32.totalorder %s15, 0
      %p77 = por %p75, %p76
      %s79 = sadd.s32 %s78, 1
      %p82 = scmp.eq.s32.totalorder %s9, 3
      %p83 = scmp.ne.s32.totalorder %s78, %s80
      %p84 = scmp.eq.s32.totalorder %s9, 0
      %p85 = por %p83, %p84
      %p86 = scmp.ne.s32.totalorder %s78, %s80
      %p87 = scmp.eq.s32.totalorder %s14, 3
      %p88 = por %p86, %p87
      %p89 = scmp.ne.s32.totalorder %s80, %s81
      %p90 = scmp.eq.s32.totalorder %s14, 0
      %p91 = por %p89, %p90
      %p92 = scmp.ne.s32.totalorder %s80, %s81
      %p93 = scmp.eq.s32.totalorder %s15, 3
      %p94 = por %p92, %p93
      %p96 = scmp.ne.s32.totalorder %s81, %s95
      %p97 = scmp.eq.s32.totalorder %s15, 0
      %p98 = por %p96, %p97
      %s99 = ssub.s32 %s16, %s28
      %s100 = ssub.s32 %s17, %s24
      %s101 = sor.u32 %s99, %s100
      %p102 = scmp.eq.s32.totalorder %s101, 0
      %s104 = sadd.s32 %s103, 1
      %s105 = scalar_select %p102, %s103, %s104
      %p108 = pneg %p102
      %p109 = scmp.eq.s32.totalorder %s9, 3
      %p110 = por %p108, %p109
      %p111 = scmp.ne.s32.totalorder %s103, %s106
      %p112 = scmp.eq.s32.totalorder %s9, 0
      %p113 = por %p111, %p112
      %p114 = scmp.ne.s32.totalorder %s103, %s106
      %p115 = scmp.eq.s32.totalorder %s14, 3
      %p116 = por %p114, %p115
      %p117 = scmp.ne.s32.totalorder %s106, %s107
      %p118 = scmp.eq.s32.totalorder %s14, 0
      %p119 = por %p117, %p118
      %p120 = scmp.ne.s32.totalorder %s106, %s107
      %p121 = scmp.eq.s32.totalorder %s15, 3
      %p122 = por %p120, %p121
      %p124 = scmp.ne.s32.totalorder %s107, %s123
      %p125 = scmp.eq.s32.totalorder %s15, 0
      %p126 = por %p124, %p125
      %p127 = scmp.le.s32.totalorder 1, %s9
      %p128 = scmp.lt.s32.totalorder %s9, 5
      %p129 = pnand %p127, %p128
      %p130 = pneg %p129
      // Predicated region
      $region9: #{arcface_forward.2} parent=5 // pred_check
        _
      $region10: #{arcface_forward.2} parent=5 // pred_check_branch
        %132 = sbr.rel (%p129) target = $region12
      $region11: #{arcface_forward.2} parent=5 // pred_region
        %s133 = ssub.s32 %s9, 1
        // Predicated region
        $region13: #{arcface_forward.2} parent=11 // pred_check
          %p134 = pneg %p70
        $region14: #{arcface_forward.2} parent=11 // pred_check_branch
          %136 = sbr.rel (%p134) target = $region16
        $region15: #{arcface_forward.2} parent=11 // pred_region
          _
        $region16: #{arcface_forward.2} parent=11 // pred_fallthru
          _
        // Predicated region
        $region17: #{arcface_forward.2} parent=11 // pred_check
          %p137 = pneg %p91
        $region18: #{arcface_forward.2} parent=11 // pred_check_branch
          %139 = sbr.rel (%p137) target = $region20
        $region19: #{arcface_forward.2} parent=11 // pred_region
          _
        $region20: #{arcface_forward.2} parent=11 // pred_fallthru
          _
      $region12: #{arcface_forward.2} parent=5 // pred_fallthru
        _
      %p140 = scmp.lt.s32.totalorder %s9, 4
      // Predicated region
      $region21: #{arcface_forward.2} parent=5 // pred_check
        %p141 = pneg %p140
      $region22: #{arcface_forward.2} parent=5 // pred_check_branch
        %143 = sbr.rel (%p141) target = $region24
      $region23: #{arcface_forward.2} parent=5 // pred_region
        // Predicated region
        $region25: #{arcface_forward.2} parent=23 // pred_check
          %p144 = pneg %p43
        $region26: #{arcface_forward.2} parent=23 // pred_check_branch
          %146 = sbr.rel (%p144) target = $region28
        $region27: #{arcface_forward.2} parent=23 // pred_region
          %s147 = sand.u32 %s33, 1
          %s148 = sand.u32 %s33, 1
          %s149 = smul.addr %s148, 64
          %s150 = scalar_lea.vmem [#allocation2], %s149
          %s151 = smul.u32 4, %s17
          %s152 = smul.addr %s16, 32
          %s153 = sadd.s32 %s151, %s152
          %s154 = smul.addr %s153, 4
          %s155 = scalar_lea.vmem %s0, %s154
          // Predicated region
          $region29: #{arcface_forward.2} parent=27 // pred_check
            _
          $region30: #{arcface_forward.2} parent=27 // pred_check_branch
            %157 = sbr.rel (0) target = $region32
          $region31: #{arcface_forward.2} parent=27 // pred_region
            // Predicated region
            $region33: #{arcface_forward.2} parent=31 // pred_check
              _
            $region34: #{arcface_forward.2} parent=31 // pred_check_branch
              %159 = sbr.rel target = $region36
            $region35: #{arcface_forward.2} parent=31 // pred_region
              // Predicated region
              $region48: #{arcface_forward.2} parent=35 // pred_check
                _
              $region49: #{arcface_forward.2} parent=35 // pred_check_branch
                %204 = sbr.rel (0) target = $region51
              $region50: #{arcface_forward.2} parent=35 // pred_region
                loop: start=0, step=1, limit=1
                $region52: #{arcface_forward.2} parent=50 // loop_pre_header
                  _
                $region53: #{arcface_forward.2} parent=50 // loop_header
                  %s206 = sphi 0, %s210
                  %p207 = scmp.ge.s32.totalorder %s206, 1
                  %s211 = sphi %s155, %s155
                  %s212 = sphi %s150, %s150
                $region54: #{arcface_forward.2} parent=50 // loop_header_branch
                  %209 = sbr.rel (%p207) target = $region58
                $region55: #{arcface_forward.2} parent=50 // loop_body
                  _
                $region56: #{arcface_forward.2} parent=50 // loop_footer
                  %s210 = sadd.s32 1, %s206
                $region57: #{arcface_forward.2} parent=50 // loop_footer_branch
                  %205 = sbr.rel target = $region53
                $region58: #{arcface_forward.2} parent=50 // loop_exit
                  _
                loop: start=0, step=1, limit=1
                $region59: #{arcface_forward.2} parent=50 // loop_pre_header
                  _
                $region60: #{arcface_forward.2} parent=50 // loop_header
                  %s215 = sphi 0, %s219
                  %p216 = scmp.ge.s32.totalorder %s215, 1
                  %s220 = sphi %s155, %s155
                  %s221 = sphi %s150, %s150
                $region61: #{arcface_forward.2} parent=50 // loop_header_branch
                  %218 = sbr.rel (%p216) target = $region65
                $region62: #{arcface_forward.2} parent=50 // loop_body
                  %v222 = vld [vmem:[%s220] sm:$0xf]
                  %223 = vst [vmem:[%s221] sm:$0xf] %v222
                  %v224 = vld [vmem:[%s220 + $0x4] sm:$0xf]
                  %225 = vst [vmem:[%s221 + $0x4] sm:$0xf] %v224
                  %v226 = vld [vmem:[%s220 + $0x8] sm:$0xf]
                  %227 = vst [vmem:[%s221 + $0x8] sm:$0xf] %v226
                  %v228 = vld [vmem:[%s220 + $0xc] sm:$0xf]
                  %229 = vst [vmem:[%s221 + $0xc] sm:$0xf] %v228
                  %v230 = vld [vmem:[%s220 + $0x20] sm:$0xf]
                  %231 = vst [vmem:[%s221 + $0x10] sm:$0xf] %v230
                  %v232 = vld [vmem:[%s220 + $0x24] sm:$0xf]
                  %233 = vst [vmem:[%s221 + $0x14] sm:$0xf] %v232
                  %v234 = vld [vmem:[%s220 + $0x28] sm:$0xf]
                  %235 = vst [vmem:[%s221 + $0x18] sm:$0xf] %v234
                  %v236 = vld [vmem:[%s220 + $0x2c] sm:$0xf]
                  %237 = vst [vmem:[%s221 + $0x1c] sm:$0xf] %v236
                  %v238 = vld [vmem:[%s220 + $0x40] sm:$0xf]
                  %239 = vst [vmem:[%s221 + $0x20] sm:$0xf] %v238
                  %v240 = vld [vmem:[%s220 + $0x44] sm:$0xf]
                  %241 = vst [vmem:[%s221 + $0x24] sm:$0xf] %v240
                  %v242 = vld [vmem:[%s220 + $0x48] sm:$0xf]
                  %243 = vst [vmem:[%s221 + $0x28] sm:$0xf] %v242
                  %v244 = vld [vmem:[%s220 + $0x4c] sm:$0xf]
                  %245 = vst [vmem:[%s221 + $0x2c] sm:$0xf] %v244
                  %v246 = vld [vmem:[%s220 + $0x60] sm:$0xf]
                  %247 = vst [vmem:[%s221 + $0x30] sm:$0xf] %v246
                  %v248 = vld [vmem:[%s220 + $0x64] sm:$0xf]
                  %249 = vst [vmem:[%s221 + $0x34] sm:$0xf] %v248
                  %v250 = vld [vmem:[%s220 + $0x68] sm:$0xf]
                  %251 = vst [vmem:[%s221 + $0x38] sm:$0xf] %v250
                  %v252 = vld [vmem:[%s220 + $0x6c] sm:$0xf]
                  %253 = vst [vmem:[%s221 + $0x3c] sm:$0xf] %v252
                $region63: #{arcface_forward.2} parent=50 // loop_footer
                  %s219 = sadd.s32 1, %s215
                $region64: #{arcface_forward.2} parent=50 // loop_footer_branch
                  %214 = sbr.rel target = $region60
                $region65: #{arcface_forward.2} parent=50 // loop_exit
                  _
              $region51: #{arcface_forward.2} parent=35 // pred_fallthru
                _
            $region36: #{arcface_forward.2} parent=31 // pred_fallthru
              _
            // Predicated region
            $region37: #{arcface_forward.2} parent=31 // pred_check
              _
            $region38: #{arcface_forward.2} parent=31 // pred_check_branch
              %161 = sbr.rel (0) target = $region40
            $region39: #{arcface_forward.2} parent=31 // pred_region
              loop: start=0, step=1, limit=1
              $region41: #{arcface_forward.2} parent=39 // loop_pre_header
                _
              $region42: #{arcface_forward.2} parent=39 // loop_header
                %s164 = sphi 0, %s168
                %p165 = scmp.ge.s32.totalorder %s164, 1
                %s169 = sphi %s155, %s155
                %s170 = sphi %s150, %s150
              $region43: #{arcface_forward.2} parent=39 // loop_header_branch
                %167 = sbr.rel (%p165) target = $region47
              $region44: #{arcface_forward.2} parent=39 // loop_body
                %v171 = vld [vmem:[%s169] sm:$0xf]
                %172 = vst [vmem:[%s170] sm:$0xf] %v171
                %v173 = vld [vmem:[%s169 + $0x4] sm:$0xf]
                %174 = vst [vmem:[%s170 + $0x4] sm:$0xf] %v173
                %v175 = vld [vmem:[%s169 + $0x8] sm:$0xf]
                %176 = vst [vmem:[%s170 + $0x8] sm:$0xf] %v175
                %v177 = vld [vmem:[%s169 + $0xc] sm:$0xf]
                %178 = vst [vmem:[%s170 + $0xc] sm:$0xf] %v177
                %v179 = vld [vmem:[%s169 + $0x20] sm:$0xf]
                %180 = vst [vmem:[%s170 + $0x10] sm:$0xf] %v179
                %v181 = vld [vmem:[%s169 + $0x24] sm:$0xf]
                %182 = vst [vmem:[%s170 + $0x14] sm:$0xf] %v181
                %v183 = vld [vmem:[%s169 + $0x28] sm:$0xf]
                %184 = vst [vmem:[%s170 + $0x18] sm:$0xf] %v183
                %v185 = vld [vmem:[%s169 + $0x2c] sm:$0xf]
                %186 = vst [vmem:[%s170 + $0x1c] sm:$0xf] %v185
                %v187 = vld [vmem:[%s169 + $0x40] sm:$0xf]
                %188 = vst [vmem:[%s170 + $0x20] sm:$0xf] %v187
                %v189 = vld [vmem:[%s169 + $0x44] sm:$0xf]
                %190 = vst [vmem:[%s170 + $0x24] sm:$0xf] %v189
                %v191 = vld [vmem:[%s169 + $0x48] sm:$0xf]
                %192 = vst [vmem:[%s170 + $0x28] sm:$0xf] %v191
                %v193 = vld [vmem:[%s169 + $0x4c] sm:$0xf]
                %194 = vst [vmem:[%s170 + $0x2c] sm:$0xf] %v193
                %v195 = vld [vmem:[%s169 + $0x60] sm:$0xf]
                %196 = vst [vmem:[%s170 + $0x30] sm:$0xf] %v195
                %v197 = vld [vmem:[%s169 + $0x64] sm:$0xf]
                %198 = vst [vmem:[%s170 + $0x34] sm:$0xf] %v197
                %v199 = vld [vmem:[%s169 + $0x68] sm:$0xf]
                %200 = vst [vmem:[%s170 + $0x38] sm:$0xf] %v199
                %v201 = vld [vmem:[%s169 + $0x6c] sm:$0xf]
                %202 = vst [vmem:[%s170 + $0x3c] sm:$0xf] %v201
              $region45: #{arcface_forward.2} parent=39 // loop_footer
                %s168 = sadd.s32 1, %s164
              $region46: #{arcface_forward.2} parent=39 // loop_footer_branch
                %163 = sbr.rel target = $region42
              $region47: #{arcface_forward.2} parent=39 // loop_exit
                _
            $region40: #{arcface_forward.2} parent=31 // pred_fallthru
              _
          $region32: #{arcface_forward.2} parent=27 // pred_fallthru
            _
          %254 = vnop
        $region28: #{arcface_forward.2} parent=23 // pred_fallthru
          _
      $region24: #{arcface_forward.2} parent=5 // pred_fallthru
        _
      %p255 = scmp.le.s32.totalorder 1, %s9
      %p256 = scmp.lt.s32.totalorder %s9, 5
      %p257 = pnand %p255, %p256
      %p258 = pneg %p257
      // Predicated region
      $region66: #{arcface_forward.2} parent=5 // pred_check
        _
      $region67: #{arcface_forward.2} parent=5 // pred_check_branch
        %260 = sbr.rel (%p257) target = $region69
      $region68: #{arcface_forward.2} parent=5 // pred_region
        %s261 = ssub.s32 %s9, 1
        %s262 = sand.u32 %s36, 1
        %s263 = sand.u32 %s36, 1
        %s264 = smul.addr %s263, 64
        %s265 = scalar_lea.vmem [#allocation2], %s264
        // Predicated region
        $region70: #{arcface_forward.2} parent=68 // pred_check
          %p266 = pneg %p49
        $region71: #{arcface_forward.2} parent=68 // pred_check_branch
          %268 = sbr.rel (%p266) target = $region73
        $region72: #{arcface_forward.2} parent=68 // pred_region
          _
        $region73: #{arcface_forward.2} parent=68 // pred_fallthru
          _
        %s269 = sand.u32 %s36, 1
        %s270 = sand.u32 %s36, 1
        %s271 = smul.addr %s270, 64
        %s272 = scalar_lea.vmem [#allocation2], %s271
        %p273 = pneg %p49
        %p274 = pneg %p46
        %p275 = pneg %p70
        %p276 = pneg %p67
        %p277 = pneg %p91
        %p278 = pneg %p88
        %p279 = pneg %p119
        %p280 = pneg %p116
        %s281 = smul.u32 4, %s19
        %p282 = scmp.lt.s32.totalorder %s18, 1
        %s283 = scalar_select %p282, %s18, 1
        %p284 = scmp.lt.s32.totalorder %s281, 7
        %s285 = scalar_select %p284, %s281, 7
        %s286 = smul.addr %s283, 8
        %s287 = sadd.s32 %s285, %s286
        %s288 = smul.addr %s287, 4
        %s289 = scalar_lea.vmem %s3, %s288
        %s290 = smul.u32 4, %s19
        %s291 = smul.u32 4, %s19
        %p292 = scmp.lt.s32.totalorder %s18, 1
        %s293 = scalar_select %p292, %s18, 1
        %p294 = scmp.lt.s32.totalorder %s291, 7
        %s295 = scalar_select %p294, %s291, 7
        %s296 = smul.addr %s293, 8
        %s297 = sadd.s32 %s295, %s296
        %s298 = smul.addr %s297, 4
        %s299 = scalar_lea.vmem %s3, %s298
        %s300 = smul.u32 4, %s19
        %v302 = vld [vmem:[%s1] sm:$0xf]
        %v303 = vld [vmem:[%s1 + $0x4] sm:$0xf]
        %v304 = vld [vmem:[%s1 + $0x8] sm:$0xf]
        %v305 = vld [vmem:[%s1 + $0xc] sm:$0xf]
        %v306 = vld [vmem:[%s2] sm:$0x1]
        %v307 = vld [vmem:[%s265] sm:$0xf]
        %v308 = vld [vmem:[%s265 + $0x4] sm:$0xf]
        %v309 = vld [vmem:[%s265 + $0x8] sm:$0xf]
        %v310 = vld [vmem:[%s265 + $0xc] sm:$0xf]
        %v312 = vlaneseq
        %v313 = vshrl.u32 %v312, 7
        %v314 = vsub.s32 0, %v313
        %v315 = vrot.slane %v306, %v314
        %v321 = vunpack.c.l.b16 %v307
        %v322 = vunpack.c.l.b16 %v308
        %v323 = vunpack.c.l.b16 %v309
        %v324 = vunpack.c.l.b16 %v310
        %v325 = vpack.c.b16 %v322, %v321
        %v326 = vpack.c.b16 %v324, %v323
        %v331 = vunpack.c.l.b16 %v302
        %v332 = vunpack.c.l.b16 %v303
        %v333 = vunpack.c.l.b16 %v304
        %v334 = vunpack.c.l.b16 %v305
        %v335 = vpack.c.b16 %v332, %v331
        %v336 = vpack.c.b16 %v334, %v333
        %vm339 = vcmask 261120
        %v341 = vsel %vm339, %v325, 0
        %v344 = vsel %vm339, %v326, 0
        %346 = vmatprep.subr.bf16.mxu0 0
        %347 = vmatpush1.bf16.msra.mxu0 %v335
        %348 = vmatprep.subr.bf16.mxu0 0
        %349 = vmatpush1.bf16.msra.mxu0 %v336
        %350 = vmatprep.subr.bf16.mxu0 0
        %351 = vmatpush1.bf16.msra.mxu0 0
        %352 = vmatprep.subr.bf16.mxu0 0
        %353 = vmatpush1.bf16.msra.mxu0 0
        %354 = vmatprep.subr.bf16.mxu0 0
        %355 = vmatpush1.bf16.msra.mxu0 0
        %356 = vmatprep.subr.bf16.mxu0 0
        %357 = vmatpush1.bf16.msra.mxu0 0
        %358 = vmatprep.subr.bf16.mxu0 0
        %359 = vmatpush1.bf16.msra.mxu0 0
        %360 = vmatprep.subr.bf16.mxu0 0
        %361 = vmatpush1.bf16.msra.mxu0 0
        %362 = vmatprep.subr.bf16.mxu0 0
        %363 = vmatpush1.bf16.msra.mxu0 0
        %364 = vmatprep.subr.bf16.mxu0 0
        %365 = vmatpush1.bf16.msra.mxu0 0
        %366 = vmatprep.subr.bf16.mxu0 0
        %367 = vmatpush1.bf16.msra.mxu0 0
        %368 = vmatprep.subr.bf16.mxu0 0
        %369 = vmatpush1.bf16.msra.mxu0 0
        %370 = vmatprep.subr.bf16.mxu0 0
        %371 = vmatpush1.bf16.msra.mxu0 0
        %372 = vmatprep.subr.bf16.mxu0 0
        %373 = vmatpush1.bf16.msra.mxu0 0
        %374 = vmatprep.subr.bf16.mxu0 0
        %375 = vmatpush1.bf16.msra.mxu0 0
        %376 = vmatprep.subr.bf16.mxu0 0
        %377 = vmatpush1.bf16.msra.mxu0 0
        %378 = vmatprep.mubr.bf16.mxu0 0
        %379 = vmatmul.mubr.bf16.gmra.mrb[0].mxu0 %v341
        %v380 = vpop.f32.mrb[0].mxu0
        %v381 = vadd.f32 %v315, %v380
        %v382 = vpop.f32.mrb[0].mxu0
        %v383 = vpop.f32.mrb[0].mxu0
        %v384 = vadd.f32 %v315, %v383
        %v385 = vpop.f32.mrb[0].mxu0
        %386 = vmatprep.mubr.bf16.mxu0 0
        %387 = vmatmul.mubr.bf16.gmra.mrb[0].mxu0 %v344
        %v388 = vpop.f32.mrb[0].mxu0
        %v389 = vadd.f32 %v315, %v388
        %v390 = vpop.f32.mrb[0].mxu0
        %v391 = vpop.f32.mrb[0].mxu0
        %v392 = vadd.f32 %v315, %v391
        %v393 = vpop.f32.mrb[0].mxu0
        %394 = vdwg.mxu0
        %v395 = vmax.f32 %v381, 0.0
        %v396 = vmax.f32 %v384, 0.0
        %v397 = vmax.f32 %v389, 0.0
        %v398 = vmax.f32 %v392, 0.0
        %s399 = scalar_lea.vmem %s265, 16 [#allocation2]
        %v400 = vld [vmem:[%s399] sm:$0xf]
        %v401 = vld [vmem:[%s399 + $0x4] sm:$0xf]
        %v402 = vld [vmem:[%s399 + $0x8] sm:$0xf]
        %v403 = vld [vmem:[%s399 + $0xc] sm:$0xf]
        %v408 = vunpack.c.l.b16 %v400
        %v409 = vunpack.c.l.b16 %v401
        %v410 = vunpack.c.l.b16 %v402
        %v411 = vunpack.c.l.b16 %v403
        %v412 = vpack.c.b16 %v409, %v408
        %v413 = vpack.c.b16 %v411, %v410
        %v415 = vsel %vm339, %v412, 0
        %v418 = vsel %vm339, %v413, 0
        %420 = vmatprep.subr.bf16.mxu0 0
        %421 = vmatpush1.bf16.msra.mxu0 %v335
        %422 = vmatprep.subr.bf16.mxu0 0
        %423 = vmatpush1.bf16.msra.mxu0 %v336
        %424 = vmatprep.subr.bf16.mxu0 0
        %425 = vmatpush1.bf16.msra.mxu0 0
        %426 = vmatprep.subr.bf16.mxu0 0
        %427 = vmatpush1.bf16.msra.mxu0 0
        %428 = vmatprep.subr.bf16.mxu0 0
        %429 = vmatpush1.bf16.msra.mxu0 0
        %430 = vmatprep.subr.bf16.mxu0 0
        %431 = vmatpush1.bf16.msra.mxu0 0
        %432 = vmatprep.subr.bf16.mxu0 0
        %433 = vmatpush1.bf16.msra.mxu0 0
        %434 = vmatprep.subr.bf16.mxu0 0
        %435 = vmatpush1.bf16.msra.mxu0 0
        %436 = vmatprep.subr.bf16.mxu0 0
        %437 = vmatpush1.bf16.msra.mxu0 0
        %438 = vmatprep.subr.bf16.mxu0 0
        %439 = vmatpush1.bf16.msra.mxu0 0
        %440 = vmatprep.subr.bf16.mxu0 0
        %441 = vmatpush1.bf16.msra.mxu0 0
        %442 = vmatprep.subr.bf16.mxu0 0
        %443 = vmatpush1.bf16.msra.mxu0 0
        %444 = vmatprep.subr.bf16.mxu0 0
        %445 = vmatpush1.bf16.msra.mxu0 0
        %446 = vmatprep.subr.bf16.mxu0 0
        %447 = vmatpush1.bf16.msra.mxu0 0
        %448 = vmatprep.subr.bf16.mxu0 0
        %449 = vmatpush1.bf16.msra.mxu0 0
        %450 = vmatprep.subr.bf16.mxu0 0
        %451 = vmatpush1.bf16.msra.mxu0 0
        %452 = vmatprep.mubr.bf16.mxu0 0
        %453 = vmatmul.mubr.bf16.gmra.mrb[0].mxu0 %v415
        %v454 = vpop.f32.mrb[0].mxu0
        %v455 = vadd.f32 %v315, %v454
        %v456 = vpop.f32.mrb[0].mxu0
        %v457 = vpop.f32.mrb[0].mxu0
        %v458 = vadd.f32 %v315, %v457
        %v459 = vpop.f32.mrb[0].mxu0
        %460 = vmatprep.mubr.bf16.mxu0 0
        %461 = vmatmul.mubr.bf16.gmra.mrb[0].mxu0 %v418
        %v462 = vpop.f32.mrb[0].mxu0
        %v463 = vadd.f32 %v315, %v462
        %v464 = vpop.f32.mrb[0].mxu0
        %v465 = vpop.f32.mrb[0].mxu0
        %v466 = vadd.f32 %v315, %v465
        %v467 = vpop.f32.mrb[0].mxu0
        %468 = vdwg.mxu0
        %v469 = vmax.f32 %v455, 0.0
        %v470 = vmax.f32 %v458, 0.0
        %v471 = vmax.f32 %v463, 0.0
        %v472 = vmax.f32 %v466, 0.0
        %v473 = vmax.f32 %v395, %v469
        %v474 = vmax.f32 %v396, %v470
        %v475 = vmax.f32 %v397, %v471
        %v476 = vmax.f32 %v398, %v472
        %s477 = scalar_lea.vmem %s265, 32 [#allocation2]
        %v478 = vld [vmem:[%s477] sm:$0xf]
        %v479 = vld [vmem:[%s477 + $0x4] sm:$0xf]
        %v480 = vld [vmem:[%s477 + $0x8] sm:$0xf]
        %v481 = vld [vmem:[%s477 + $0xc] sm:$0xf]
        %v486 = vunpack.c.l.b16 %v478
        %v487 = vunpack.c.l.b16 %v479
        %v488 = vunpack.c.l.b16 %v480
        %v489 = vunpack.c.l.b16 %v481
        %v490 = vpack.c.b16 %v487, %v486
        %v491 = vpack.c.b16 %v489, %v488
        %v493 = vsel %vm339, %v490, 0
        %v496 = vsel %vm339, %v491, 0
        %498 = vmatprep.subr.bf16.mxu0 0
        %499 = vmatpush1.bf16.msra.mxu0 %v335
        %500 = vmatprep.subr.bf16.mxu0 0
        %501 = vmatpush1.bf16.msra.mxu0 %v336
        %502 = vmatprep.subr.bf16.mxu0 0
        %503 = vmatpush1.bf16.msra.mxu0 0
        %504 = vmatprep.subr.bf16.mxu0 0
        %505 = vmatpush1.bf16.msra.mxu0 0
        %506 = vmatprep.subr.bf16.mxu0 0
        %507 = vmatpush1.bf16.msra.mxu0 0
        %508 = vmatprep.subr.bf16.mxu0 0
        %509 = vmatpush1.bf16.msra.mxu0 0
        %510 = vmatprep.subr.bf16.mxu0 0
        %511 = vmatpush1.bf16.msra.mxu0 0
        %512 = vmatprep.subr.bf16.mxu0 0
        %513 = vmatpush1.bf16.msra.mxu0 0
        %514 = vmatprep.subr.bf16.mxu0 0
        %515 = vmatpush1.bf16.msra.mxu0 0
        %516 = vmatprep.subr.bf16.mxu0 0
        %517 = vmatpush1.bf16.msra.mxu0 0
        %518 = vmatprep.subr.bf16.mxu0 0
        %519 = vmatpush1.bf16.msra.mxu0 0
        %520 = vmatprep.subr.bf16.mxu0 0
        %521 = vmatpush1.bf16.msra.mxu0 0
        %522 = vmatprep.subr.bf16.mxu0 0
        %523 = vmatpush1.bf16.msra.mxu0 0
        %524 = vmatprep.subr.bf16.mxu0 0
        %525 = vmatpush1.bf16.msra.mxu0 0
        %526 = vmatprep.subr.bf16.mxu0 0
        %527 = vmatpush1.bf16.msra.mxu0 0
        %528 = vmatprep.subr.bf16.mxu0 0
        %529 = vmatpush1.bf16.msra.mxu0 0
        %530 = vmatprep.mubr.bf16.mxu0 0
        %531 = vmatmul.mubr.bf16.gmra.mrb[0].mxu0 %v493
        %v532 = vpop.f32.mrb[0].mxu0
        %v533 = vadd.f32 %v315, %v532
        %v534 = vpop.f32.mrb[0].mxu0
        %v535 = vpop.f32.mrb[0].mxu0
        %v536 = vadd.f32 %v315, %v535
        %v537 = vpop.f32.mrb[0].mxu0
        %538 = vmatprep.mubr.bf16.mxu0 0
        %539 = vmatmul.mubr.bf16.gmra.mrb[0].mxu0 %v496
        %v540 = vpop.f32.mrb[0].mxu0
        %v541 = vadd.f32 %v315, %v540
        %v542 = vpop.f32.mrb[0].mxu0
        %v543 = vpop.f32.mrb[0].mxu0
        %v544 = vadd.f32 %v315, %v543
        %v545 = vpop.f32.mrb[0].mxu0
        %546 = vdwg.mxu0
        %v547 = vmax.f32 %v533, 0.0
        %v548 = vmax.f32 %v536, 0.0
        %v549 = vmax.f32 %v541, 0.0
        %v550 = vmax.f32 %v544, 0.0
        %s551 = scalar_lea.vmem %s265, 48 [#allocation2]
        %v552 = vld [vmem:[%s551] sm:$0xf]
        %v553 = vld [vmem:[%s551 + $0x4] sm:$0xf]
        %v554 = vld [vmem:[%s551 + $0x8] sm:$0xf]
        %v555 = vld [vmem:[%s551 + $0xc] sm:$0xf]
        %v560 = vunpack.c.l.b16 %v552
        %v561 = vunpack.c.l.b16 %v553
        %v562 = vunpack.c.l.b16 %v554
        %v563 = vunpack.c.l.b16 %v555
        %v564 = vpack.c.b16 %v561, %v560
        %v565 = vpack.c.b16 %v563, %v562
        %v567 = vsel %vm339, %v564, 0
        %v570 = vsel %vm339, %v565, 0
        %572 = vmatprep.subr.bf16.mxu0 0
        %573 = vmatpush1.bf16.msra.mxu0 %v335
        %574 = vmatprep.subr.bf16.mxu0 0
        %575 = vmatpush1.bf16.msra.mxu0 %v336
        %576 = vmatprep.subr.bf16.mxu0 0
        %577 = vmatpush1.bf16.msra.mxu0 0
        %578 = vmatprep.subr.bf16.mxu0 0
        %579 = vmatpush1.bf16.msra.mxu0 0
        %580 = vmatprep.subr.bf16.mxu0 0
        %581 = vmatpush1.bf16.msra.mxu0 0
        %582 = vmatprep.subr.bf16.mxu0 0
        %583 = vmatpush1.bf16.msra.mxu0 0
        %584 = vmatprep.subr.bf16.mxu0 0
        %585 = vmatpush1.bf16.msra.mxu0 0
        %586 = vmatprep.subr.bf16.mxu0 0
        %587 = vmatpush1.bf16.msra.mxu0 0
        %588 = vmatprep.subr.bf16.mxu0 0
        %589 = vmatpush1.bf16.msra.mxu0 0
        %590 = vmatprep.subr.bf16.mxu0 0
        %591 = vmatpush1.bf16.msra.mxu0 0
        %592 = vmatprep.subr.bf16.mxu0 0
        %593 = vmatpush1.bf16.msra.mxu0 0
        %594 = vmatprep.subr.bf16.mxu0 0
        %595 = vmatpush1.bf16.msra.mxu0 0
        %596 = vmatprep.subr.bf16.mxu0 0
        %597 = vmatpush1.bf16.msra.mxu0 0
        %598 = vmatprep.subr.bf16.mxu0 0
        %599 = vmatpush1.bf16.msra.mxu0 0
        %600 = vmatprep.subr.bf16.mxu0 0
        %601 = vmatpush1.bf16.msra.mxu0 0
        %602 = vmatprep.subr.bf16.mxu0 0
        %603 = vmatpush1.bf16.msra.mxu0 0
        %604 = vmatprep.mubr.bf16.mxu0 0
        %605 = vmatmul.mubr.bf16.gmra.mrb[0].mxu0 %v567
        %v606 = vpop.f32.mrb[0].mxu0
        %v607 = vadd.f32 %v315, %v606
        %v608 = vpop.f32.mrb[0].mxu0
        %v609 = vpop.f32.mrb[0].mxu0
        %v610 = vadd.f32 %v315, %v609
        %v611 = vpop.f32.mrb[0].mxu0
        %612 = vmatprep.mubr.bf16.mxu0 0
        %613 = vmatmul.mubr.bf16.gmra.mrb[0].mxu0 %v570
        %v614 = vpop.f32.mrb[0].mxu0
        %v615 = vadd.f32 %v315, %v614
        %v616 = vpop.f32.mrb[0].mxu0
        %v617 = vpop.f32.mrb[0].mxu0
        %v618 = vadd.f32 %v315, %v617
        %v619 = vpop.f32.mrb[0].mxu0
        %620 = vdwg.mxu0
        %v621 = vmax.f32 %v607, 0.0
        %v622 = vmax.f32 %v610, 0.0
        %v623 = vmax.f32 %v615, 0.0
        %v624 = vmax.f32 %v618, 0.0
        %v625 = vmax.f32 %v547, %v621
        %v626 = vmax.f32 %v548, %v622
        %v627 = vmax.f32 %v549, %v623
        %v628 = vmax.f32 %v550, %v624
        %v629 = vmax.f32 %v473, %v625
        %v630 = vmax.f32 %v474, %v626
        %v631 = vmax.f32 %v475, %v627
        %v632 = vmax.f32 %v476, %v628
        %v633 = vpack.c.bf16 %v630, %v629
        %v634 = vpack.c.bf16 %v632, %v631
        %v637 = vunpack.c.l.b16 %v633
        %v638 = vunpack.c.h.b16 %v633
        %v639 = vunpack.c.l.b16 %v634
        %v640 = vunpack.c.h.b16 %v634
        %v641 = vpack.c.b16 %v637, %v637
        %v642 = vpack.c.b16 %v638, %v638
        %v643 = vpack.c.b16 %v639, %v639
        %v644 = vpack.c.b16 %v640, %v640
        %vm649 = vcmask 519168
        %650 = vst.msk [vmem:[%s299] sm:$0xf] %vm649, %v641
        %651 = vst.msk [vmem:[%s299 + $0x4] sm:$0xf] %vm649, %v642
        %652 = vst.msk [vmem:[%s299 + $0x8] sm:$0xf] %vm649, %v643
        %653 = vst.msk [vmem:[%s299 + $0xc] sm:$0xf] %vm649, %v644
        %s654 = smul.u32 4, %s19
        %p655 = scmp.lt.s32.totalorder %s18, 1
        %s656 = scalar_select %p655, %s18, 1
        %p657 = scmp.lt.s32.totalorder %s654, 7
        %s658 = scalar_select %p657, %s654, 7
        %s659 = smul.addr %s656, 8
        %s660 = sadd.s32 %s658, %s659
        %s661 = smul.addr %s660, 4
        %s662 = scalar_lea.vmem %s3, %s661
        // Predicated region
        $region74: #{arcface_forward.2} parent=68 // pred_check
          %p663 = pneg %p116
        $region75: #{arcface_forward.2} parent=68 // pred_check_branch
          %665 = sbr.rel (%p663) target = $region77
        $region76: #{arcface_forward.2} parent=68 // pred_region
          %s666 = smul.u32 4, %s19
        $region77: #{arcface_forward.2} parent=68 // pred_fallthru
          _
      $region69: #{arcface_forward.2} parent=5 // pred_fallthru
        _
      %p667 = scmp.le.s32.totalorder 2, %s9
      // Predicated region
      $region78: #{arcface_forward.2} parent=5 // pred_check
        %p668 = pneg %p667
      $region79: #{arcface_forward.2} parent=5 // pred_check_branch
        %670 = sbr.rel (%p668) target = $region81
      $region80: #{arcface_forward.2} parent=5 // pred_region
        %s671 = ssub.s32 %s9, 2
        // Predicated region
        $region82: #{arcface_forward.2} parent=80 // pred_check
          %p672 = pneg %p122
        $region83: #{arcface_forward.2} parent=80 // pred_check_branch
          %674 = sbr.rel (%p672) target = $region85
        $region84: #{arcface_forward.2} parent=80 // pred_region
          %s675 = smul.u32 4, %s21
          %p676 = scmp.lt.s32.totalorder %s20, 1
          %s677 = scalar_select %p676, %s20, 1
          %p678 = scmp.lt.s32.totalorder %s675, 7
          %s679 = scalar_select %p678, %s675, 7
          %s680 = smul.addr %s677, 8
          %s681 = sadd.s32 %s679, %s680
          %s682 = smul.addr %s681, 4
          %s683 = scalar_lea.vmem %s3, %s682
        $region85: #{arcface_forward.2} parent=80 // pred_fallthru
          _
      $region81: #{arcface_forward.2} parent=5 // pred_fallthru
        _
    $region6: #{arcface_forward.2} parent=1 // loop_footer
      %s13 = sadd.s32 1, %s9
    $region7: #{arcface_forward.2} parent=1 // loop_footer_branch
      %8 = sbr.rel target = $region3
    $region8: #{arcface_forward.2} parent=1 // loop_exit
      _

// kernel: arcface_forward.3
$region0: #{arcface_forward.3}
  #allocation0 [shape = 'u32[]', space=smem, size = 0x4, offset = 0x4, fixed_abs, tag = 'smem constant byte address 0x4 - core index']
  #allocation1 [shape = 'u32[144,128]{1,0:T(1,128)}', space=vmem, size = 0x12000, scoped, tag = 'internal scratch']
  #allocation2 [shape = 'f32[2,128]{1,0:T(2,128)}', space=vmem, size = 0x400, scoped, tag = 'scratch operand']
  %s0 = inlined_call_operand.vmem [shape: bf16[2,4096], index: 0, kind: input, shape index: {}]
  %s1 = inlined_call_operand.vmem [shape: bf16[4096,128], index: 1, kind: input, shape index: {}]
  %s2 = inlined_call_operand.vmem [shape: f32[1,128], index: 2, kind: input, shape index: {}]
  %s3 = inlined_call_operand.hbm [shape: f32[2,128], index: 3, kind: output, shape index: {}]
  %s4 = sld [smem:[#allocation0]]
  $region53: #{arcface_forward.3} parent=0
    _
  %s6 = ssub.s32 1, %s4
  %s7 = scalar_select 0, %s6, %s4
  $region1: #{arcface_forward.3} parent=0
    #allocation3 [shape = 'u8[1024]{0}', space=vmem, size = 0x400, scoped, tag = 'output window, operand 0, single buffered']
    #allocation4 [shape = 's32[2]{0}', space=sflag, size = 0x8, scoped, tag = 'scoped memory for arcface_forward.3']
    %8 = vsyncpa [#allocation4], 0
    loop: start=0, step=1, limit=4
    $region2: #{arcface_forward.3} parent=1 // loop_pre_header
      _
    $region3: #{arcface_forward.3} parent=1 // loop_header
      %s10 = sphi 0, %s14
      %p11 = scmp.ge.s32.totalorder %s10, 4
      %s20 = sphi 0, %s22
      %s23 = sphi 0, %s20
      %s24 = sphi 0, %s23
      %s40 = sphi 0, %s24
      %s46 = sphi 0, %s48
      %s49 = sphi 0, %s46
      %s50 = sphi 0, %s49
      %s66 = sphi 0, %s50
      %s70 = sphi 0, %s70
      %s72 = sphi 0, %s70
      %s73 = sphi 0, %s72
      %s87 = sphi 0, %s73
      %s91 = sphi 0, %s91
      %s93 = sphi 0, %s91
      %s94 = sphi 0, %s93
      %s108 = sphi 0, %s94
    $region4: #{arcface_forward.3} parent=1 // loop_header_branch
      %13 = sbr.rel (%p11) target = $region8
    $region5: #{arcface_forward.3} parent=1 // loop_body
      %s15 = ssub.s32 %s10, 1
      %s16 = ssub.s32 %s10, 2
      %s17 = sadd.s32 %s10, 1
      %s18 = ssub.s32 %s10, %s17
      %p19 = scmp.eq.s32.totalorder %s18, 0
      %s21 = sadd.s32 %s20, 1
      %s22 = scalar_select %p19, %s20, %s21
      %p25 = pneg %p19
      %p26 = scmp.eq.s32.totalorder %s10, 1
      %p27 = por %p25, %p26
      %p28 = scmp.ne.s32.totalorder %s20, %s23
      %p29 = scmp.eq.s32.totalorder %s10, 0
      %p30 = por %p28, %p29
      %p31 = scmp.ne.s32.totalorder %s20, %s23
      %p32 = scmp.eq.s32.totalorder %s15, 1
      %p33 = por %p31, %p32
      %p34 = scmp.ne.s32.totalorder %s23, %s24
      %p35 = scmp.eq.s32.totalorder %s15, 0
      %p36 = por %p34, %p35
      %p37 = scmp.ne.s32.totalorder %s23, %s24
      %p38 = scmp.eq.s32.totalorder %s16, 1
      %p39 = por %p37, %p38
      %p41 = scmp.ne.s32.totalorder %s24, %s40
      %p42 = scmp.eq.s32.totalorder %s16, 0
      %p43 = por %p41, %p42
      %s44 = ssub.s32 %s10, %s17
      %p45 = scmp.eq.s32.totalorder %s44, 0
      %s47 = sadd.s32 %s46, 1
      %s48 = scalar_select %p45, %s46, %s47
      %p51 = pneg %p45
      %p52 = scmp.eq.s32.totalorder %s10, 1
      %p53 = por %p51, %p52
      %p54 = scmp.ne.s32.totalorder %s46, %s49
      %p55 = scmp.eq.s32.totalorder %s10, 0
      %p56 = por %p54, %p55
      %p57 = scmp.ne.s32.totalorder %s46, %s49
      %p58 = scmp.eq.s32.totalorder %s15, 1
      %p59 = por %p57, %p58
      %p60 = scmp.ne.s32.totalorder %s49, %s50
      %p61 = scmp.eq.s32.totalorder %s15, 0
      %p62 = por %p60, %p61
      %p63 = scmp.ne.s32.totalorder %s49, %s50
      %p64 = scmp.eq.s32.totalorder %s16, 1
      %p65 = por %p63, %p64
      %p67 = scmp.ne.s32.totalorder %s50, %s66
      %p68 = scmp.eq.s32.totalorder %s16, 0
      %p69 = por %p67, %p68
      %s71 = sadd.s32 %s70, 1
      %p74 = scmp.eq.s32.totalorder %s10, 1
      %p75 = scmp.ne.s32.totalorder %s70, %s72
      %p76 = scmp.eq.s32.totalorder %s10, 0
      %p77 = por %p75, %p76
      %p78 = scmp.ne.s32.totalorder %s70, %s72
      %p79 = scmp.eq.s32.totalorder %s15, 1
      %p80 = por %p78, %p79
      %p81 = scmp.ne.s32.totalorder %s72, %s73
      %p82 = scmp.eq.s32.totalorder %s15, 0
      %p83 = por %p81, %p82
      %p84 = scmp.ne.s32.totalorder %s72, %s73
      %p85 = scmp.eq.s32.totalorder %s16, 1
      %p86 = por %p84, %p85
      %p88 = scmp.ne.s32.totalorder %s73, %s87
      %p89 = scmp.eq.s32.totalorder %s16, 0
      %p90 = por %p88, %p89
      %s92 = sadd.s32 %s91, 1
      %p95 = scmp.eq.s32.totalorder %s10, 1
      %p96 = scmp.ne.s32.totalorder %s91, %s93
      %p97 = scmp.eq.s32.totalorder %s10, 0
      %p98 = por %p96, %p97
      %p99 = scmp.ne.s32.totalorder %s91, %s93
      %p100 = scmp.eq.s32.totalorder %s15, 1
      %p101 = por %p99, %p100
      %p102 = scmp.ne.s32.totalorder %s93, %s94
      %p103 = scmp.eq.s32.totalorder %s15, 0
      %p104 = por %p102, %p103
      %p105 = scmp.ne.s32.totalorder %s93, %s94
      %p106 = scmp.eq.s32.totalorder %s16, 1
      %p107 = por %p105, %p106
      %p109 = scmp.ne.s32.totalorder %s94, %s108
      %p110 = scmp.eq.s32.totalorder %s16, 0
      %p111 = por %p109, %p110
      %p112 = scmp.le.s32.totalorder 1, %s10
      %p113 = scmp.lt.s32.totalorder %s10, 3
      %p114 = pnand %p112, %p113
      %p115 = pneg %p114
      // Predicated region
      $region9: #{arcface_forward.3} parent=5 // pred_check
        _
      $region10: #{arcface_forward.3} parent=5 // pred_check_branch
        %117 = sbr.rel (%p114) target = $region12
      $region11: #{arcface_forward.3} parent=5 // pred_region
        %s118 = ssub.s32 %s10, 1
        // Predicated region
        $region13: #{arcface_forward.3} parent=11 // pred_check
          %p119 = pneg %p83
        $region14: #{arcface_forward.3} parent=11 // pred_check_branch
          %121 = sbr.rel (%p119) target = $region16
        $region15: #{arcface_forward.3} parent=11 // pred_region
          _
        $region16: #{arcface_forward.3} parent=11 // pred_fallthru
          _
      $region12: #{arcface_forward.3} parent=5 // pred_fallthru
        _
      %p122 = scmp.lt.s32.totalorder %s10, 2
      // Predicated region
      $region17: #{arcface_forward.3} parent=5 // pred_check
        %p123 = pneg %p122
      $region18: #{arcface_forward.3} parent=5 // pred_check_branch
        %125 = sbr.rel (%p123) target = $region20
      $region19: #{arcface_forward.3} parent=5 // pred_region
        // Predicated region
        $region21: #{arcface_forward.3} parent=19 // pred_check
          %p126 = pneg %p30
        $region22: #{arcface_forward.3} parent=19 // pred_check_branch
          %128 = sbr.rel (%p126) target = $region24
        $region23: #{arcface_forward.3} parent=19 // pred_region
          %s129 = smul.u32 16, %s10
          %p130 = scmp.lt.s32.totalorder %s129, 31
          %s131 = scalar_select %p130, %s129, 31
          %s132 = scalar_lea.vmem %s0, %s131
          %s133 = smul.u32 16, %s10
        $region24: #{arcface_forward.3} parent=19 // pred_fallthru
          _
        // Predicated region
        $region25: #{arcface_forward.3} parent=19 // pred_check
          %p134 = pneg %p56
        $region26: #{arcface_forward.3} parent=19 // pred_check_branch
          %136 = sbr.rel (%p134) target = $region28
        $region27: #{arcface_forward.3} parent=19 // pred_region
          %s137 = smul.u32 256, %s10
          %p138 = scmp.lt.s32.totalorder %s137, 511
          %s139 = scalar_select %p138, %s137, 511
          %s140 = smul.addr %s139, 4
          %s141 = scalar_lea.vmem %s1, %s140
          %s142 = smul.u32 256, %s10
        $region28: #{arcface_forward.3} parent=19 // pred_fallthru
          _
      $region20: #{arcface_forward.3} parent=5 // pred_fallthru
        _
      %p143 = scmp.le.s32.totalorder 1, %s10
      %p144 = scmp.lt.s32.totalorder %s10, 3
      %p145 = pnand %p143, %p144
      %p146 = pneg %p145
      // Predicated region
      $region29: #{arcface_forward.3} parent=5 // pred_check
        _
      $region30: #{arcface_forward.3} parent=5 // pred_check_branch
        %148 = sbr.rel (%p145) target = $region32
      $region31: #{arcface_forward.3} parent=5 // pred_region
        %s149 = ssub.s32 %s10, 1
        %s150 = smul.u32 16, %s15
        %p151 = scmp.lt.s32.totalorder %s150, 31
        %s152 = scalar_select %p151, %s150, 31
        %s153 = scalar_lea.vmem %s0, %s152
        %p154 = pneg %p36
        %p155 = pneg %p33
        %s156 = smul.u32 256, %s15
        %p157 = scmp.lt.s32.totalorder %s156, 511
        %s158 = scalar_select %p157, %s156, 511
        %s159 = smul.addr %s158, 4
        %s160 = scalar_lea.vmem %s1, %s159
        %p161 = pneg %p62
        %p162 = pneg %p59
        %p163 = pneg %p83
        %p164 = pneg %p80
        %p165 = pneg %p104
        %p166 = pneg %p101
        %s167 = smul.u32 16, %s15
        %p168 = scmp.lt.s32.totalorder %s167, 31
        %s169 = scalar_select %p168, %s167, 31
        %s170 = scalar_lea.vmem %s0, %s169
        %s171 = smul.u32 16, %s15
        %s172 = smul.u32 256, %s15
        %p173 = scmp.lt.s32.totalorder %s172, 511
        %s174 = scalar_select %p173, %s172, 511
        %s175 = smul.addr %s174, 4
        %s176 = scalar_lea.vmem %s1, %s175
        %s177 = smul.u32 256, %s15
        %p179 = scmp.eq.s32.totalorder %s15, 0
        // Predicated region
        $region33: #{arcface_forward.3} parent=31 // pred_check
          %p180 = pneg %p179
        $region34: #{arcface_forward.3} parent=31 // pred_check_branch
          %182 = sbr.rel (%p180) target = $region36
        $region35: #{arcface_forward.3} parent=31 // pred_region
          %183 = vst [vmem:[#allocation2] sm:$0x3] 0.0
        $region36: #{arcface_forward.3} parent=31 // pred_fallthru
          _
        %v184 = vld [vmem:[#allocation2] sm:$0x3]
        %v185 = vld [vmem:[%s170] sm:$0xff]
        %v186 = vld [vmem:[%s170 + $0x8] sm:$0xff]
        %v187 = vld [vmem:[%s176] sm:$0xf]
        %v188 = vld [vmem:[%s176 + $0x4] sm:$0xf]
        %v189 = vld [vmem:[%s176 + $0x8] sm:$0xf]
        %v190 = vld [vmem:[%s176 + $0xc] sm:$0xf]
        %v191 = vld [vmem:[%s176 + $0x10] sm:$0xf]
        %v192 = vld [vmem:[%s176 + $0x14] sm:$0xf]
        %v193 = vld [vmem:[%s176 + $0x18] sm:$0xf]
        %v194 = vld [vmem:[%s176 + $0x1c] sm:$0xf]
        %v195 = vld [vmem:[%s176 + $0x20] sm:$0xf]
        %v196 = vld [vmem:[%s176 + $0x24] sm:$0xf]
        %v197 = vld [vmem:[%s176 + $0x28] sm:$0xf]
        %v198 = vld [vmem:[%s176 + $0x2c] sm:$0xf]
        %v199 = vld [vmem:[%s176 + $0x30] sm:$0xf]
        %v200 = vld [vmem:[%s176 + $0x34] sm:$0xf]
        %v201 = vld [vmem:[%s176 + $0x38] sm:$0xf]
        %v202 = vld [vmem:[%s176 + $0x3c] sm:$0xf]
        %v203 = vld [vmem:[%s176 + $0x40] sm:$0xf]
        %v204 = vld [vmem:[%s176 + $0x44] sm:$0xf]
        %v205 = vld [vmem:[%s176 + $0x48] sm:$0xf]
        %v206 = vld [vmem:[%s176 + $0x4c] sm:$0xf]
        %v207 = vld [vmem:[%s176 + $0x50] sm:$0xf]
        %v208 = vld [vmem:[%s176 + $0x54] sm:$0xf]
        %v209 = vld [vmem:[%s176 + $0x58] sm:$0xf]
        %v210 = vld [vmem:[%s176 + $0x5c] sm:$0xf]
        %v211 = vld [vmem:[%s176 + $0x60] sm:$0xf]
        %v212 = vld [vmem:[%s176 + $0x64] sm:$0xf]
        %v213 = vld [vmem:[%s176 + $0x68] sm:$0xf]
        %v214 = vld [vmem:[%s176 + $0x6c] sm:$0xf]
        %v215 = vld [vmem:[%s176 + $0x70] sm:$0xf]
        %v216 = vld [vmem:[%s176 + $0x74] sm:$0xf]
        %v217 = vld [vmem:[%s176 + $0x78] sm:$0xf]
        %v218 = vld [vmem:[%s176 + $0x7c] sm:$0xf]
        %v219 = vld [vmem:[%s176 + $0x80] sm:$0xf]
        %v220 = vld [vmem:[%s176 + $0x84] sm:$0xf]
        %v221 = vld [vmem:[%s176 + $0x88] sm:$0xf]
        %v222 = vld [vmem:[%s176 + $0x8c] sm:$0xf]
        %v223 = vld [vmem:[%s176 + $0x90] sm:$0xf]
        %v224 = vld [vmem:[%s176 + $0x94] sm:$0xf]
        %v225 = vld [vmem:[%s176 + $0x98] sm:$0xf]
        %v226 = vld [vmem:[%s176 + $0x9c] sm:$0xf]
        %v227 = vld [vmem:[%s176 + $0xa0] sm:$0xf]
        %v228 = vld [vmem:[%s176 + $0xa4] sm:$0xf]
        %v229 = vld [vmem:[%s176 + $0xa8] sm:$0xf]
        %v230 = vld [vmem:[%s176 + $0xac] sm:$0xf]
        %v231 = vld [vmem:[%s176 + $0xb0] sm:$0xf]
        %v232 = vld [vmem:[%s176 + $0xb4] sm:$0xf]
        %v233 = vld [vmem:[%s176 + $0xb8] sm:$0xf]
        %v234 = vld [vmem:[%s176 + $0xbc] sm:$0xf]
        %v235 = vld [vmem:[%s176 + $0xc0] sm:$0xf]
        %v236 = vld [vmem:[%s176 + $0xc4] sm:$0xf]
        %v237 = vld [vmem:[%s176 + $0xc8] sm:$0xf]
        %v238 = vld [vmem:[%s176 + $0xcc] sm:$0xf]
        %v239 = vld [vmem:[%s176 + $0xd0] sm:$0xf]
        %v240 = vld [vmem:[%s176 + $0xd4] sm:$0xf]
        %v241 = vld [vmem:[%s176 + $0xd8] sm:$0xf]
        %v242 = vld [vmem:[%s176 + $0xdc] sm:$0xf]
        %v243 = vld [vmem:[%s176 + $0xe0] sm:$0xf]
        %v244 = vld [vmem:[%s176 + $0xe4] sm:$0xf]
        %v245 = vld [vmem:[%s176 + $0xe8] sm:$0xf]
        %v246 = vld [vmem:[%s176 + $0xec] sm:$0xf]
        %v247 = vld [vmem:[%s176 + $0xf0] sm:$0xf]
        %v248 = vld [vmem:[%s176 + $0xf4] sm:$0xf]
        %v249 = vld [vmem:[%s176 + $0xf8] sm:$0xf]
        %v250 = vld [vmem:[%s176 + $0xfc] sm:$0xf]
        %v251 = vld [vmem:[%s176 + $0x100] sm:$0xf]
        %v252 = vld [vmem:[%s176 + $0x104] sm:$0xf]
        %v253 = vld [vmem:[%s176 + $0x108] sm:$0xf]
        %v254 = vld [vmem:[%s176 + $0x10c] sm:$0xf]
        %v255 = vld [vmem:[%s176 + $0x110] sm:$0xf]
        %v256 = vld [vmem:[%s176 + $0x114] sm:$0xf]
        %v257 = vld [vmem:[%s176 + $0x118] sm:$0xf]
        %v258 = vld [vmem:[%s176 + $0x11c] sm:$0xf]
        %v259 = vld [vmem:[%s176 + $0x120] sm:$0xf]
        %v260 = vld [vmem:[%s176 + $0x124] sm:$0xf]
        %v261 = vld [vmem:[%s176 + $0x128] sm:$0xf]
        %v262 = vld [vmem:[%s176 + $0x12c] sm:$0xf]
        %v263 = vld [vmem:[%s176 + $0x130] sm:$0xf]
        %v264 = vld [vmem:[%s176 + $0x134] sm:$0xf]
        %v265 = vld [vmem:[%s176 + $0x138] sm:$0xf]
        %v266 = vld [vmem:[%s176 + $0x13c] sm:$0xf]
        %v267 = vld [vmem:[%s176 + $0x140] sm:$0xf]
        %v268 = vld [vmem:[%s176 + $0x144] sm:$0xf]
        %v269 = vld [vmem:[%s176 + $0x148] sm:$0xf]
        %v270 = vld [vmem:[%s176 + $0x14c] sm:$0xf]
        %v271 = vld [vmem:[%s176 + $0x150] sm:$0xf]
        %v272 = vld [vmem:[%s176 + $0x154] sm:$0xf]
        %v273 = vld [vmem:[%s176 + $0x158] sm:$0xf]
        %v274 = vld [vmem:[%s176 + $0x15c] sm:$0xf]
        %v275 = vld [vmem:[%s176 + $0x160] sm:$0xf]
        %v276 = vld [vmem:[%s176 + $0x164] sm:$0xf]
        %v277 = vld [vmem:[%s176 + $0x168] sm:$0xf]
        %v278 = vld [vmem:[%s176 + $0x16c] sm:$0xf]
        %v279 = vld [vmem:[%s176 + $0x170] sm:$0xf]
        %v280 = vld [vmem:[%s176 + $0x174] sm:$0xf]
        %v281 = vld [vmem:[%s176 + $0x178] sm:$0xf]
        %v282 = vld [vmem:[%s176 + $0x17c] sm:$0xf]
        %v283 = vld [vmem:[%s176 + $0x180] sm:$0xf]
        %v284 = vld [vmem:[%s176 + $0x184] sm:$0xf]
        %v285 = vld [vmem:[%s176 + $0x188] sm:$0xf]
        %v286 = vld [vmem:[%s176 + $0x18c] sm:$0xf]
        %v287 = vld [vmem:[%s176 + $0x190] sm:$0xf]
        %v288 = vld [vmem:[%s176 + $0x194] sm:$0xf]
        %v289 = vld [vmem:[%s176 + $0x198] sm:$0xf]
        %v290 = vld [vmem:[%s176 + $0x19c] sm:$0xf]
        %v291 = vld [vmem:[%s176 + $0x1a0] sm:$0xf]
        %v292 = vld [vmem:[%s176 + $0x1a4] sm:$0xf]
        %v293 = vld [vmem:[%s176 + $0x1a8] sm:$0xf]
        %v294 = vld [vmem:[%s176 + $0x1ac] sm:$0xf]
        %v295 = vld [vmem:[%s176 + $0x1b0] sm:$0xf]
        %v296 = vld [vmem:[%s176 + $0x1b4] sm:$0xf]
        %v297 = vld [vmem:[%s176 + $0x1b8] sm:$0xf]
        %v298 = vld [vmem:[%s176 + $0x1bc] sm:$0xf]
        %v299 = vld [vmem:[%s176 + $0x1c0] sm:$0xf]
        %v300 = vld [vmem:[%s176 + $0x1c4] sm:$0xf]
        %v301 = vld [vmem:[%s176 + $0x1c8] sm:$0xf]
        %v302 = vld [vmem:[%s176 + $0x1cc] sm:$0xf]
        %v303 = vld [vmem:[%s176 + $0x1d0] sm:$0xf]
        %v304 = vld [vmem:[%s176 + $0x1d4] sm:$0xf]
        %v305 = vld [vmem:[%s176 + $0x1d8] sm:$0xf]
        %v306 = vld [vmem:[%s176 + $0x1dc] sm:$0xf]
        %v307 = vld [vmem:[%s176 + $0x1e0] sm:$0xf]
        %v308 = vld [vmem:[%s176 + $0x1e4] sm:$0xf]
        %v309 = vld [vmem:[%s176 + $0x1e8] sm:$0xf]
        %v310 = vld [vmem:[%s176 + $0x1ec] sm:$0xf]
        %v311 = vld [vmem:[%s176 + $0x1f0] sm:$0xf]
        %v312 = vld [vmem:[%s176 + $0x1f4] sm:$0xf]
        %v313 = vld [vmem:[%s176 + $0x1f8] sm:$0xf]
        %v314 = vld [vmem:[%s176 + $0x1fc] sm:$0xf]
        %v315 = vld [vmem:[%s176 + $0x200] sm:$0xf]
        %v316 = vld [vmem:[%s176 + $0x204] sm:$0xf]
        %v317 = vld [vmem:[%s176 + $0x208] sm:$0xf]
        %v318 = vld [vmem:[%s176 + $0x20c] sm:$0xf]
        %v319 = vld [vmem:[%s176 + $0x210] sm:$0xf]
        %v320 = vld [vmem:[%s176 + $0x214] sm:$0xf]
        %v321 = vld [vmem:[%s176 + $0x218] sm:$0xf]
        %v322 = vld [vmem:[%s176 + $0x21c] sm:$0xf]
        %v323 = vld [vmem:[%s176 + $0x220] sm:$0xf]
        %v324 = vld [vmem:[%s176 + $0x224] sm:$0xf]
        %v325 = vld [vmem:[%s176 + $0x228] sm:$0xf]
        %v326 = vld [vmem:[%s176 + $0x22c] sm:$0xf]
        %v327 = vld [vmem:[%s176 + $0x230] sm:$0xf]
        %v328 = vld [vmem:[%s176 + $0x234] sm:$0xf]
        %v329 = vld [vmem:[%s176 + $0x238] sm:$0xf]
        %v330 = vld [vmem:[%s176 + $0x23c] sm:$0xf]
        %v331 = vld [vmem:[%s176 + $0x240] sm:$0xf]
        %v332 = vld [vmem:[%s176 + $0x244] sm:$0xf]
        %v333 = vld [vmem:[%s176 + $0x248] sm:$0xf]
        %v334 = vld [vmem:[%s176 + $0x24c] sm:$0xf]
        %v335 = vld [vmem:[%s176 + $0x250] sm:$0xf]
        %v336 = vld [vmem:[%s176 + $0x254] sm:$0xf]
        %v337 = vld [vmem:[%s176 + $0x258] sm:$0xf]
        %v338 = vld [vmem:[%s176 + $0x25c] sm:$0xf]
        %v339 = vld [vmem:[%s176 + $0x260] sm:$0xf]
        %v340 = vld [vmem:[%s176 + $0x264] sm:$0xf]
        %v341 = vld [vmem:[%s176 + $0x268] sm:$0xf]
        %v342 = vld [vmem:[%s176 + $0x26c] sm:$0xf]
        %v343 = vld [vmem:[%s176 + $0x270] sm:$0xf]
        %v344 = vld [vmem:[%s176 + $0x274] sm:$0xf]
        %v345 = vld [vmem:[%s176 + $0x278] sm:$0xf]
        %v346 = vld [vmem:[%s176 + $0x27c] sm:$0xf]
        %v347 = vld [vmem:[%s176 + $0x280] sm:$0xf]
        %v348 = vld [vmem:[%s176 + $0x284] sm:$0xf]
        %v349 = vld [vmem:[%s176 + $0x288] sm:$0xf]
        %v350 = vld [vmem:[%s176 + $0x28c] sm:$0xf]
        %v351 = vld [vmem:[%s176 + $0x290] sm:$0xf]
        %v352 = vld [vmem:[%s176 + $0x294] sm:$0xf]
        %v353 = vld [vmem:[%s176 + $0x298] sm:$0xf]
        %v354 = vld [vmem:[%s176 + $0x29c] sm:$0xf]
        %v355 = vld [vmem:[%s176 + $0x2a0] sm:$0xf]
        %v356 = vld [vmem:[%s176 + $0x2a4] sm:$0xf]
        %v357 = vld [vmem:[%s176 + $0x2a8] sm:$0xf]
        %v358 = vld [vmem:[%s176 + $0x2ac] sm:$0xf]
        %v359 = vld [vmem:[%s176 + $0x2b0] sm:$0xf]
        %v360 = vld [vmem:[%s176 + $0x2b4] sm:$0xf]
        %v361 = vld [vmem:[%s176 + $0x2b8] sm:$0xf]
        %v362 = vld [vmem:[%s176 + $0x2bc] sm:$0xf]
        %v363 = vld [vmem:[%s176 + $0x2c0] sm:$0xf]
        %v364 = vld [vmem:[%s176 + $0x2c4] sm:$0xf]
        %v365 = vld [vmem:[%s176 + $0x2c8] sm:$0xf]
        %v366 = vld [vmem:[%s176 + $0x2cc] sm:$0xf]
        %v367 = vld [vmem:[%s176 + $0x2d0] sm:$0xf]
        %v368 = vld [vmem:[%s176 + $0x2d4] sm:$0xf]
        %v369 = vld [vmem:[%s176 + $0x2d8] sm:$0xf]
        %v370 = vld [vmem:[%s176 + $0x2dc] sm:$0xf]
        %v371 = vld [vmem:[%s176 + $0x2e0] sm:$0xf]
        %v372 = vld [vmem:[%s176 + $0x2e4] sm:$0xf]
        %v373 = vld [vmem:[%s176 + $0x2e8] sm:$0xf]
        %v374 = vld [vmem:[%s176 + $0x2ec] sm:$0xf]
        %v375 = vld [vmem:[%s176 + $0x2f0] sm:$0xf]
        %v376 = vld [vmem:[%s176 + $0x2f4] sm:$0xf]
        %v377 = vld [vmem:[%s176 + $0x2f8] sm:$0xf]
        %v378 = vld [vmem:[%s176 + $0x2fc] sm:$0xf]
        %v379 = vld [vmem:[%s176 + $0x300] sm:$0xf]
        %v380 = vld [vmem:[%s176 + $0x304] sm:$0xf]
        %v381 = vld [vmem:[%s176 + $0x308] sm:$0xf]
        %v382 = vld [vmem:[%s176 + $0x30c] sm:$0xf]
        %v383 = vld [vmem:[%s176 + $0x310] sm:$0xf]
        %v384 = vld [vmem:[%s176 + $0x314] sm:$0xf]
        %v385 = vld [vmem:[%s176 + $0x318] sm:$0xf]
        %v386 = vld [vmem:[%s176 + $0x31c] sm:$0xf]
        %v387 = vld [vmem:[%s176 + $0x320] sm:$0xf]
        %v388 = vld [vmem:[%s176 + $0x324] sm:$0xf]
        %v389 = vld [vmem:[%s176 + $0x328] sm:$0xf]
        %v390 = vld [vmem:[%s176 + $0x32c] sm:$0xf]
        %v391 = vld [vmem:[%s176 + $0x330] sm:$0xf]
        %v392 = vld [vmem:[%s176 + $0x334] sm:$0xf]
        %v393 = vld [vmem:[%s176 + $0x338] sm:$0xf]
        %v394 = vld [vmem:[%s176 + $0x33c] sm:$0xf]
        %v395 = vld [vmem:[%s176 + $0x340] sm:$0xf]
        %v396 = vld [vmem:[%s176 + $0x344] sm:$0xf]
        %v397 = vld [vmem:[%s176 + $0x348] sm:$0xf]
        %v398 = vld [vmem:[%s176 + $0x34c] sm:$0xf]
        %v399 = vld [vmem:[%s176 + $0x350] sm:$0xf]
        %v400 = vld [vmem:[%s176 + $0x354] sm:$0xf]
        %v401 = vld [vmem:[%s176 + $0x358] sm:$0xf]
        %v402 = vld [vmem:[%s176 + $0x35c] sm:$0xf]
        %v403 = vld [vmem:[%s176 + $0x360] sm:$0xf]
        %v404 = vld [vmem:[%s176 + $0x364] sm:$0xf]
        %v405 = vld [vmem:[%s176 + $0x368] sm:$0xf]
        %v406 = vld [vmem:[%s176 + $0x36c] sm:$0xf]
        %v407 = vld [vmem:[%s176 + $0x370] sm:$0xf]
        %v408 = vld [vmem:[%s176 + $0x374] sm:$0xf]
        %v409 = vld [vmem:[%s176 + $0x378] sm:$0xf]
        %v410 = vld [vmem:[%s176 + $0x37c] sm:$0xf]
        %v411 = vld [vmem:[%s176 + $0x380] sm:$0xf]
        %v412 = vld [vmem:[%s176 + $0x384] sm:$0xf]
        %v413 = vld [vmem:[%s176 + $0x388] sm:$0xf]
        %v414 = vld [vmem:[%s176 + $0x38c] sm:$0xf]
        %v415 = vld [vmem:[%s176 + $0x390] sm:$0xf]
        %v416 = vld [vmem:[%s176 + $0x394] sm:$0xf]
        %v417 = vld [vmem:[%s176 + $0x398] sm:$0xf]
        %v418 = vld [vmem:[%s176 + $0x39c] sm:$0xf]
        %v419 = vld [vmem:[%s176 + $0x3a0] sm:$0xf]
        %v420 = vld [vmem:[%s176 + $0x3a4] sm:$0xf]
        %v421 = vld [vmem:[%s176 + $0x3a8] sm:$0xf]
        %v422 = vld [vmem:[%s176 + $0x3ac] sm:$0xf]
        %v423 = vld [vmem:[%s176 + $0x3b0] sm:$0xf]
        %v424 = vld [vmem:[%s176 + $0x3b4] sm:$0xf]
        %v425 = vld [vmem:[%s176 + $0x3b8] sm:$0xf]
        %v426 = vld [vmem:[%s176 + $0x3bc] sm:$0xf]
        %v427 = vld [vmem:[%s176 + $0x3c0] sm:$0xf]
        %v428 = vld [vmem:[%s176 + $0x3c4] sm:$0xf]
        %v429 = vld [vmem:[%s176 + $0x3c8] sm:$0xf]
        %v430 = vld [vmem:[%s176 + $0x3cc] sm:$0xf]
        %v431 = vld [vmem:[%s176 + $0x3d0] sm:$0xf]
        %v432 = vld [vmem:[%s176 + $0x3d4] sm:$0xf]
        %v433 = vld [vmem:[%s176 + $0x3d8] sm:$0xf]
        %v434 = vld [vmem:[%s176 + $0x3dc] sm:$0xf]
        %v435 = vld [vmem:[%s176 + $0x3e0] sm:$0xf]
        %v436 = vld [vmem:[%s176 + $0x3e4] sm:$0xf]
        %v437 = vld [vmem:[%s176 + $0x3e8] sm:$0xf]
        %v438 = vld [vmem:[%s176 + $0x3ec] sm:$0xf]
        %v439 = vld [vmem:[%s176 + $0x3f0] sm:$0xf]
        %v440 = vld [vmem:[%s176 + $0x3f4] sm:$0xf]
        %v441 = vld [vmem:[%s176 + $0x3f8] sm:$0xf]
        %v442 = vld [vmem:[%s176 + $0x3fc] sm:$0xf]
        %v445 = vcombine.high %v185, %v185
        %v447 = vunpack.c.l.s4 1966171168
        %v448 = vunpack.c.0.s8 %v447
        %v449 = vlaneseq
        %v450 = vshrl.u32 %v449, 7
        %v451 = vsub.s32 %v448, %v450
        %v452 = vrot.slane %v185, %v451
        %v454 = vunpack.c.l.s4 1966171168
        %v455 = vunpack.c.0.s8 %v454
        %v456 = vlaneseq
        %v457 = vshrl.u32 %v456, 7
        %v458 = vsub.s32 %v455, %v457
        %v459 = vrot.slane %v445, %v458
        %v460 = vcombine.high %v452, %v452
        %v461 = vcombine.high %v459, %v459
        %v463 = vunpack.c.l.s4 1966171168
        %v464 = vunpack.c.0.s8 %v463
        %v465 = vlaneseq
        %v466 = vshrl.u32 %v465, 7
        %v467 = vsub.s32 %v464, %v466
        %v468 = vrot.slane %v452, %v467
        %v470 = vunpack.c.l.s4 1966171168
        %v471 = vunpack.c.0.s8 %v470
        %v472 = vlaneseq
        %v473 = vshrl.u32 %v472, 7
        %v474 = vsub.s32 %v471, %v473
        %v475 = vrot.slane %v459, %v474
        %v477 = vunpack.c.l.s4 1966171168
        %v478 = vunpack.c.0.s8 %v477
        %v479 = vlaneseq
        %v480 = vshrl.u32 %v479, 7
        %v481 = vsub.s32 %v478, %v480
        %v482 = vrot.slane %v460, %v481
        %v484 = vunpack.c.l.s4 1966171168
        %v485 = vunpack.c.0.s8 %v484
        %v486 = vlaneseq
        %v487 = vshrl.u32 %v486, 7
        %v488 = vsub.s32 %v485, %v487
        %v489 = vrot.slane %v461, %v488
        %v490 = vcombine.high %v468, %v468
        %v491 = vcombine.high %v475, %v475
        %v492 = vcombine.high %v482, %v482
        %v493 = vcombine.high %v489, %v489
        %v494 = vcombine.high %v186, %v186
        %v496 = vunpack.c.l.s4 1966171168
        %v497 = vunpack.c.0.s8 %v496
        %v498 = vlaneseq
        %v499 = vshrl.u32 %v498, 7
        %v500 = vsub.s32 %v497, %v499
        %v501 = vrot.slane %v186, %v500
        %v503 = vunpack.c.l.s4 1966171168
        %v504 = vunpack.c.0.s8 %v503
        %v505 = vlaneseq
        %v506 = vshrl.u32 %v505, 7
        %v507 = vsub.s32 %v504, %v506
        %v508 = vrot.slane %v494, %v507
        %v509 = vcombine.high %v501, %v501
        %v510 = vcombine.high %v508, %v508
        %v512 = vunpack.c.l.s4 1966171168
        %v513 = vunpack.c.0.s8 %v512
        %v514 = vlaneseq
        %v515 = vshrl.u32 %v514, 7
        %v516 = vsub.s32 %v513, %v515
        %v517 = vrot.slane %v501, %v516
        %v519 = vunpack.c.l.s4 1966171168
        %v520 = vunpack.c.0.s8 %v519
        %v521 = vlaneseq
        %v522 = vshrl.u32 %v521, 7
        %v523 = vsub.s32 %v520, %v522
        %v524 = vrot.slane %v508, %v523
        %v526 = vunpack.c.l.s4 1966171168
        %v527 = vunpack.c.0.s8 %v526
        %v528 = vlaneseq
        %v529 = vshrl.u32 %v528, 7
        %v530 = vsub.s32 %v527, %v529
        %v531 = vrot.slane %v509, %v530
        %v533 = vunpack.c.l.s4 1966171168
        %v534 = vunpack.c.0.s8 %v533
        %v535 = vlaneseq
        %v536 = vshrl.u32 %v535, 7
        %v537 = vsub.s32 %v534, %v536
        %v538 = vrot.slane %v510, %v537
        %v539 = vcombine.high %v517, %v517
        %v540 = vcombine.high %v524, %v524
        %v541 = vcombine.high %v531, %v531
        %v542 = vcombine.high %v538, %v538
        %v815 = vunpack.c.l.b16 %v187
        %v816 = vunpack.c.l.b16 %v188
        %v817 = vunpack.c.l.b16 %v189
        %v818 = vunpack.c.l.b16 %v190
        %v819 = vunpack.c.l.b16 %v191
        %v820 = vunpack.c.l.b16 %v192
        %v821 = vunpack.c.l.b16 %v193
        %v822 = vunpack.c.l.b16 %v194
        %v823 = vunpack.c.l.b16 %v195
        %v824 = vunpack.c.l.b16 %v196
        %v825 = vunpack.c.l.b16 %v197
        %v826 = vunpack.c.l.b16 %v198
        %v827 = vunpack.c.l.b16 %v199
        %v828 = vunpack.c.l.b16 %v200
        %v829 = vunpack.c.l.b16 %v201
        %v830 = vunpack.c.l.b16 %v202
        %v831 = vunpack.c.l.b16 %v203
        %v832 = vunpack.c.l.b16 %v204
        %v833 = vunpack.c.l.b16 %v205
        %v834 = vunpack.c.l.b16 %v206
        %v835 = vunpack.c.l.b16 %v207
        %v836 = vunpack.c.l.b16 %v208
        %v837 = vunpack.c.l.b16 %v209
        %v838 = vunpack.c.l.b16 %v210
        %v839 = vunpack.c.l.b16 %v211
        %v840 = vunpack.c.l.b16 %v212
        %v841 = vunpack.c.l.b16 %v213
        %v842 = vunpack.c.l.b16 %v214
        %v843 = vunpack.c.l.b16 %v215
        %v844 = vunpack.c.l.b16 %v216
        %v845 = vunpack.c.l.b16 %v217
        %v846 = vunpack.c.l.b16 %v218
        %v847 = vunpack.c.l.b16 %v219
        %v848 = vunpack.c.l.b16 %v220
        %v849 = vunpack.c.l.b16 %v221
        %v850 = vunpack.c.l.b16 %v222
        %v851 = vunpack.c.l.b16 %v223
        %v852 = vunpack.c.l.b16 %v224
        %v853 = vunpack.c.l.b16 %v225
        %v854 = vunpack.c.l.b16 %v226
        %v855 = vunpack.c.l.b16 %v227
        %v856 = vunpack.c.l.b16 %v228
        %v857 = vunpack.c.l.b16 %v229
        %v858 = vunpack.c.l.b16 %v230
        %v859 = vunpack.c.l.b16 %v231
        %v860 = vunpack.c.l.b16 %v232
        %v861 = vunpack.c.l.b16 %v233
        %v862 = vunpack.c.l.b16 %v234
        %v863 = vunpack.c.l.b16 %v235
        %v864 = vunpack.c.l.b16 %v236
        %v865 = vunpack.c.l.b16 %v237
        %v866 = vunpack.c.l.b16 %v238
        %v867 = vunpack.c.l.b16 %v239
        %v868 = vunpack.c.l.b16 %v240
        %v869 = vunpack.c.l.b16 %v241
        %v870 = vunpack.c.l.b16 %v242
        %v871 = vunpack.c.l.b16 %v243
        %v872 = vunpack.c.l.b16 %v244
        %v873 = vunpack.c.l.b16 %v245
        %v874 = vunpack.c.l.b16 %v246
        %v875 = vunpack.c.l.b16 %v247
        %v876 = vunpack.c.l.b16 %v248
        %v877 = vunpack.c.l.b16 %v249
        %v878 = vunpack.c.l.b16 %v250
        %v879 = vunpack.c.l.b16 %v251
        %v880 = vunpack.c.l.b16 %v252
        %v881 = vunpack.c.l.b16 %v253
        %v882 = vunpack.c.l.b16 %v254
        %v883 = vunpack.c.l.b16 %v255
        %v884 = vunpack.c.l.b16 %v256
        %v885 = vunpack.c.l.b16 %v257
        %v886 = vunpack.c.l.b16 %v258
        %v887 = vunpack.c.l.b16 %v259
        %v888 = vunpack.c.l.b16 %v260
        %v889 = vunpack.c.l.b16 %v261
        %v890 = vunpack.c.l.b16 %v262
        %v891 = vunpack.c.l.b16 %v263
        %v892 = vunpack.c.l.b16 %v264
        %v893 = vunpack.c.l.b16 %v265
        %v894 = vunpack.c.l.b16 %v266
        %v895 = vunpack.c.l.b16 %v267
        %v896 = vunpack.c.l.b16 %v268
        %v897 = vunpack.c.l.b16 %v269
        %v898 = vunpack.c.l.b16 %v270
        %v899 = vunpack.c.l.b16 %v271
        %v900 = vunpack.c.l.b16 %v272
        %v901 = vunpack.c.l.b16 %v273
        %v902 = vunpack.c.l.b16 %v274
        %v903 = vunpack.c.l.b16 %v275
        %v904 = vunpack.c.l.b16 %v276
        %v905 = vunpack.c.l.b16 %v277
        %v906 = vunpack.c.l.b16 %v278
        %v907 = vunpack.c.l.b16 %v279
        %v908 = vunpack.c.l.b16 %v280
        %v909 = vunpack.c.l.b16 %v281
        %v910 = vunpack.c.l.b16 %v282
        %v911 = vunpack.c.l.b16 %v283
        %v912 = vunpack.c.l.b16 %v284
        %v913 = vunpack.c.l.b16 %v285
        %v914 = vunpack.c.l.b16 %v286
        %v915 = vunpack.c.l.b16 %v287
        %v916 = vunpack.c.l.b16 %v288
        %v917 = vunpack.c.l.b16 %v289
        %v918 = vunpack.c.l.b16 %v290
        %v919 = vunpack.c.l.b16 %v291
        %v920 = vunpack.c.l.b16 %v292
        %v921 = vunpack.c.l.b16 %v293
        %v922 = vunpack.c.l.b16 %v294
        %v923 = vunpack.c.l.b16 %v295
        %v924 = vunpack.c.l.b16 %v296
        %v925 = vunpack.c.l.b16 %v297
        %v926 = vunpack.c.l.b16 %v298
        %v927 = vunpack.c.l.b16 %v299
        %v928 = vunpack.c.l.b16 %v300
        %v929 = vunpack.c.l.b16 %v301
        %v930 = vunpack.c.l.b16 %v302
        %v931 = vunpack.c.l.b16 %v303
        %v932 = vunpack.c.l.b16 %v304
        %v933 = vunpack.c.l.b16 %v305
        %v934 = vunpack.c.l.b16 %v306
        %v935 = vunpack.c.l.b16 %v307
        %v936 = vunpack.c.l.b16 %v308
        %v937 = vunpack.c.l.b16 %v309
        %v938 = vunpack.c.l.b16 %v310
        %v939 = vunpack.c.l.b16 %v311
        %v940 = vunpack.c.l.b16 %v312
        %v941 = vunpack.c.l.b16 %v313
        %v942 = vunpack.c.l.b16 %v314
        %v943 = vunpack.c.l.b16 %v315
        %v944 = vunpack.c.l.b16 %v316
        %v945 = vunpack.c.l.b16 %v317
        %v946 = vunpack.c.l.b16 %v318
        %v947 = vunpack.c.l.b16 %v319
        %v948 = vunpack.c.l.b16 %v320
        %v949 = vunpack.c.l.b16 %v321
        %v950 = vunpack.c.l.b16 %v322
        %v951 = vunpack.c.l.b16 %v323
        %v952 = vunpack.c.l.b16 %v324
        %v953 = vunpack.c.l.b16 %v325
        %v954 = vunpack.c.l.b16 %v326
        %v955 = vunpack.c.l.b16 %v327
        %v956 = vunpack.c.l.b16 %v328
        %v957 = vunpack.c.l.b16 %v329
        %v958 = vunpack.c.l.b16 %v330
        %v959 = vunpack.c.l.b16 %v331
        %v960 = vunpack.c.l.b16 %v332
        %v961 = vunpack.c.l.b16 %v333
        %v962 = vunpack.c.l.b16 %v334
        %v963 = vunpack.c.l.b16 %v335
        %v964 = vunpack.c.l.b16 %v336
        %v965 = vunpack.c.l.b16 %v337
        %v966 = vunpack.c.l.b16 %v338
        %v967 = vunpack.c.l.b16 %v339
        %v968 = vunpack.c.l.b16 %v340
        %v969 = vunpack.c.l.b16 %v341
        %v970 = vunpack.c.l.b16 %v342
        %v971 = vunpack.c.l.b16 %v343
        %v972 = vunpack.c.l.b16 %v344
        %v973 = vunpack.c.l.b16 %v345
        %v974 = vunpack.c.l.b16 %v346
        %v975 = vunpack.c.l.b16 %v347
        %v976 = vunpack.c.l.b16 %v348
        %v977 = vunpack.c.l.b16 %v349
        %v978 = vunpack.c.l.b16 %v350
        %v979 = vunpack.c.l.b16 %v351
        %v980 = vunpack.c.l.b16 %v352
        %v981 = vunpack.c.l.b16 %v353
        %v982 = vunpack.c.l.b16 %v354
        %v983 = vunpack.c.l.b16 %v355
        %v984 = vunpack.c.l.b16 %v356
        %v985 = vunpack.c.l.b16 %v357
        %v986 = vunpack.c.l.b16 %v358
        %v987 = vunpack.c.l.b16 %v359
        %v988 = vunpack.c.l.b16 %v360
        %v989 = vunpack.c.l.b16 %v361
        %v990 = vunpack.c.l.b16 %v362
        %v991 = vunpack.c.l.b16 %v363
        %v992 = vunpack.c.l.b16 %v364
        %v993 = vunpack.c.l.b16 %v365
        %v994 = vunpack.c.l.b16 %v366
        %v995 = vunpack.c.l.b16 %v367
        %v996 = vunpack.c.l.b16 %v368
        %v997 = vunpack.c.l.b16 %v369
        %v998 = vunpack.c.l.b16 %v370
        %v999 = vunpack.c.l.b16 %v371
        %v1000 = vunpack.c.l.b16 %v372
        %v1001 = vunpack.c.l.b16 %v373
        %v1002 = vunpack.c.l.b16 %v374
        %v1003 = vunpack.c.l.b16 %v375
        %v1004 = vunpack.c.l.b16 %v376
        %v1005 = vunpack.c.l.b16 %v377
        %v1006 = vunpack.c.l.b16 %v378
        %v1007 = vunpack.c.l.b16 %v379
        %v1008 = vunpack.c.l.b16 %v380
        %v1009 = vunpack.c.l.b16 %v381
        %v1010 = vunpack.c.l.b16 %v382
        %v1011 = vunpack.c.l.b16 %v383
        %v1012 = vunpack.c.l.b16 %v384
        %v1013 = vunpack.c.l.b16 %v385
        %v1014 = vunpack.c.l.b16 %v386
        %v1015 = vunpack.c.l.b16 %v387
        %v1016 = vunpack.c.l.b16 %v388
        %v1017 = vunpack.c.l.b16 %v389
        %v1018 = vunpack.c.l.b16 %v390
        %v1019 = vunpack.c.l.b16 %v391
        %v1020 = vunpack.c.l.b16 %v392
        %v1021 = vunpack.c.l.b16 %v393
        %v1022 = vunpack.c.l.b16 %v394
        %v1023 = vunpack.c.l.b16 %v395
        %v1024 = vunpack.c.l.b16 %v396
        %v1025 = vunpack.c.l.b16 %v397
        %v1026 = vunpack.c.l.b16 %v398
        %v1027 = vunpack.c.l.b16 %v399
        %v1028 = vunpack.c.l.b16 %v400
        %v1029 = vunpack.c.l.b16 %v401
        %v1030 = vunpack.c.l.b16 %v402
        %v1031 = vunpack.c.l.b16 %v403
        %v1032 = vunpack.c.l.b16 %v404
        %v1033 = vunpack.c.l.b16 %v405
        %v1034 = vunpack.c.l.b16 %v406
        %v1035 = vunpack.c.l.b16 %v407
        %v1036 = vunpack.c.l.b16 %v408
        %v1037 = vunpack.c.l.b16 %v409
        %v1038 = vunpack.c.l.b16 %v410
        %v1039 = vunpack.c.l.b16 %v411
        %v1040 = vunpack.c.l.b16 %v412
        %v1041 = vunpack.c.l.b16 %v413
        %v1042 = vunpack.c.l.b16 %v414
        %v1043 = vunpack.c.l.b16 %v415
        %v1044 = vunpack.c.l.b16 %v416
        %v1045 = vunpack.c.l.b16 %v417
        %v1046 = vunpack.c.l.b16 %v418
        %v1047 = vunpack.c.l.b16 %v419
        %v1048 = vunpack.c.l.b16 %v420
        %v1049 = vunpack.c.l.b16 %v421
        %v1050 = vunpack.c.l.b16 %v422
        %v1051 = vunpack.c.l.b16 %v423
        %v1052 = vunpack.c.l.b16 %v424
        %v1053 = vunpack.c.l.b16 %v425
        %v1054 = vunpack.c.l.b16 %v426
        %v1055 = vunpack.c.l.b16 %v427
        %v1056 = vunpack.c.l.b16 %v428
        %v1057 = vunpack.c.l.b16 %v429
        %v1058 = vunpack.c.l.b16 %v430
        %v1059 = vunpack.c.l.b16 %v431
        %v1060 = vunpack.c.l.b16 %v432
        %v1061 = vunpack.c.l.b16 %v433
        %v1062 = vunpack.c.l.b16 %v434
        %v1063 = vunpack.c.l.b16 %v435
        %v1064 = vunpack.c.l.b16 %v436
        %v1065 = vunpack.c.l.b16 %v437
        %v1066 = vunpack.c.l.b16 %v438
        %v1067 = vunpack.c.l.b16 %v439
        %v1068 = vunpack.c.l.b16 %v440
        %v1069 = vunpack.c.l.b16 %v441
        %v1070 = vunpack.c.l.b16 %v442
        %v1071 = vpack.c.b16 %v816, %v815
        %v1072 = vpack.c.b16 %v818, %v817
        %v1073 = vpack.c.b16 %v820, %v819
        %v1074 = vpack.c.b16 %v822, %v821
        %v1075 = vpack.c.b16 %v824, %v823
        %v1076 = vpack.c.b16 %v826, %v825
        %v1077 = vpack.c.b16 %v828, %v827
        %v1078 = vpack.c.b16 %v830, %v829
        %v1079 = vpack.c.b16 %v832, %v831
        %v1080 = vpack.c.b16 %v834, %v833
        %v1081 = vpack.c.b16 %v836, %v835
        %v1082 = vpack.c.b16 %v838, %v837
        %v1083 = vpack.c.b16 %v840, %v839
        %v1084 = vpack.c.b16 %v842, %v841
        %v1085 = vpack.c.b16 %v844, %v843
        %v1086 = vpack.c.b16 %v846, %v845
        %v1087 = vpack.c.b16 %v848, %v847
        %v1088 = vpack.c.b16 %v850, %v849
        %v1089 = vpack.c.b16 %v852, %v851
        %v1090 = vpack.c.b16 %v854, %v853
        %v1091 = vpack.c.b16 %v856, %v855
        %v1092 = vpack.c.b16 %v858, %v857
        %v1093 = vpack.c.b16 %v860, %v859
        %v1094 = vpack.c.b16 %v862, %v861
        %v1095 = vpack.c.b16 %v864, %v863
        %v1096 = vpack.c.b16 %v866, %v865
        %v1097 = vpack.c.b16 %v868, %v867
        %v1098 = vpack.c.b16 %v870, %v869
        %v1099 = vpack.c.b16 %v872, %v871
        %v1100 = vpack.c.b16 %v874, %v873
        %v1101 = vpack.c.b16 %v876, %v875
        %v1102 = vpack.c.b16 %v878, %v877
        %v1103 = vpack.c.b16 %v880, %v879
        %v1104 = vpack.c.b16 %v882, %v881
        %v1105 = vpack.c.b16 %v884, %v883
        %v1106 = vpack.c.b16 %v886, %v885
        %v1107 = vpack.c.b16 %v888, %v887
        %v1108 = vpack.c.b16 %v890, %v889
        %v1109 = vpack.c.b16 %v892, %v891
        %v1110 = vpack.c.b16 %v894, %v893
        %v1111 = vpack.c.b16 %v896, %v895
        %v1112 = vpack.c.b16 %v898, %v897
        %v1113 = vpack.c.b16 %v900, %v899
        %v1114 = vpack.c.b16 %v902, %v901
        %v1115 = vpack.c.b16 %v904, %v903
        %v1116 = vpack.c.b16 %v906, %v905
        %v1117 = vpack.c.b16 %v908, %v907
        %v1118 = vpack.c.b16 %v910, %v909
        %v1119 = vpack.c.b16 %v912, %v911
        %v1120 = vpack.c.b16 %v914, %v913
        %v1121 = vpack.c.b16 %v916, %v915
        %v1122 = vpack.c.b16 %v918, %v917
        %v1123 = vpack.c.b16 %v920, %v919
        %v1124 = vpack.c.b16 %v922, %v921
        %v1125 = vpack.c.b16 %v924, %v923
        %v1126 = vpack.c.b16 %v926, %v925
        %v1127 = vpack.c.b16 %v928, %v927
        %v1128 = vpack.c.b16 %v930, %v929
        %v1129 = vpack.c.b16 %v932, %v931
        %v1130 = vpack.c.b16 %v934, %v933
        %v1131 = vpack.c.b16 %v936, %v935
        %v1132 = vpack.c.b16 %v938, %v937
        %v1133 = vpack.c.b16 %v940, %v939
        %v1134 = vpack.c.b16 %v942, %v941
        %v1135 = vpack.c.b16 %v944, %v943
        %v1136 = vpack.c.b16 %v946, %v945
        %v1137 = vpack.c.b16 %v948, %v947
        %v1138 = vpack.c.b16 %v950, %v949
        %v1139 = vpack.c.b16 %v952, %v951
        %v1140 = vpack.c.b16 %v954, %v953
        %v1141 = vpack.c.b16 %v956, %v955
        %v1142 = vpack.c.b16 %v958, %v957
        %v1143 = vpack.c.b16 %v960, %v959
        %v1144 = vpack.c.b16 %v962, %v961
        %v1145 = vpack.c.b16 %v964, %v963
        %v1146 = vpack.c.b16 %v966, %v965
        %v1147 = vpack.c.b16 %v968, %v967
        %v1148 = vpack.c.b16 %v970, %v969
        %v1149 = vpack.c.b16 %v972, %v971
        %v1150 = vpack.c.b16 %v974, %v973
        %v1151 = vpack.c.b16 %v976, %v975
        %v1152 = vpack.c.b16 %v978, %v977
        %v1153 = vpack.c.b16 %v980, %v979
        %v1154 = vpack.c.b16 %v982, %v981
        %v1155 = vpack.c.b16 %v984, %v983
        %v1156 = vpack.c.b16 %v986, %v985
        %v1157 = vpack.c.b16 %v988, %v987
        %v1158 = vpack.c.b16 %v990, %v989
        %v1159 = vpack.c.b16 %v992, %v991
        %v1160 = vpack.c.b16 %v994, %v993
        %v1161 = vpack.c.b16 %v996, %v995
        %v1162 = vpack.c.b16 %v998, %v997
        %v1163 = vpack.c.b16 %v1000, %v999
        %v1164 = vpack.c.b16 %v1002, %v1001
        %v1165 = vpack.c.b16 %v1004, %v1003
        %v1166 = vpack.c.b16 %v1006, %v1005
        %v1167 = vpack.c.b16 %v1008, %v1007
        %v1168 = vpack.c.b16 %v1010, %v1009
        %v1169 = vpack.c.b16 %v1012, %v1011
        %v1170 = vpack.c.b16 %v1014, %v1013
        %v1171 = vpack.c.b16 %v1016, %v1015
        %v1172 = vpack.c.b16 %v1018, %v1017
        %v1173 = vpack.c.b16 %v1020, %v1019
        %v1174 = vpack.c.b16 %v1022, %v1021
        %v1175 = vpack.c.b16 %v1024, %v1023
        %v1176 = vpack.c.b16 %v1026, %v1025
        %v1177 = vpack.c.b16 %v1028, %v1027
        %v1178 = vpack.c.b16 %v1030, %v1029
        %v1179 = vpack.c.b16 %v1032, %v1031
        %v1180 = vpack.c.b16 %v1034, %v1033
        %v1181 = vpack.c.b16 %v1036, %v1035
        %v1182 = vpack.c.b16 %v1038, %v1037
        %v1183 = vpack.c.b16 %v1040, %v1039
        %v1184 = vpack.c.b16 %v1042, %v1041
        %v1185 = vpack.c.b16 %v1044, %v1043
        %v1186 = vpack.c.b16 %v1046, %v1045
        %v1187 = vpack.c.b16 %v1048, %v1047
        %v1188 = vpack.c.b16 %v1050, %v1049
        %v1189 = vpack.c.b16 %v1052, %v1051
        %v1190 = vpack.c.b16 %v1054, %v1053
        %v1191 = vpack.c.b16 %v1056, %v1055
        %v1192 = vpack.c.b16 %v1058, %v1057
        %v1193 = vpack.c.b16 %v1060, %v1059
        %v1194 = vpack.c.b16 %v1062, %v1061
        %v1195 = vpack.c.b16 %v1064, %v1063
        %v1196 = vpack.c.b16 %v1066, %v1065
        %v1197 = vpack.c.b16 %v1068, %v1067
        %v1198 = vpack.c.b16 %v1070, %v1069
        %1327 = vmatprep.subr.bf16.mxu0 0
        %1328 = vmatpush1.bf16.msra.mxu0 %v1071
        %1329 = vmatprep.subr.bf16.mxu0 0
        %1330 = vmatpush1.bf16.msra.mxu0 %v1072
        %1331 = vmatprep.subr.bf16.mxu0 0
        %1332 = vmatpush1.bf16.msra.mxu0 %v1073
        %1333 = vmatprep.subr.bf16.mxu0 0
        %1334 = vmatpush1.bf16.msra.mxu0 %v1074
        %1335 = vmatprep.subr.bf16.mxu0 0
        %1336 = vmatpush1.bf16.msra.mxu0 %v1075
        %1337 = vmatprep.subr.bf16.mxu0 0
        %1338 = vmatpush1.bf16.msra.mxu0 %v1076
        %1339 = vmatprep.subr.bf16.mxu0 0
        %1340 = vmatpush1.bf16.msra.mxu0 %v1077
        %1341 = vmatprep.subr.bf16.mxu0 0
        %1342 = vmatpush1.bf16.msra.mxu0 %v1078
        %1343 = vmatprep.subr.bf16.mxu0 0
        %1344 = vmatpush1.bf16.msra.mxu0 %v1079
        %1345 = vmatprep.subr.bf16.mxu0 0
        %1346 = vmatpush1.bf16.msra.mxu0 %v1080
        %1347 = vmatprep.subr.bf16.mxu0 0
        %1348 = vmatpush1.bf16.msra.mxu0 %v1081
        %1349 = vmatprep.subr.bf16.mxu0 0
        %1350 = vmatpush1.bf16.msra.mxu0 %v1082
        %1351 = vmatprep.subr.bf16.mxu0 0
        %1352 = vmatpush1.bf16.msra.mxu0 %v1083
        %1353 = vmatprep.subr.bf16.mxu0 0
        %1354 = vmatpush1.bf16.msra.mxu0 %v1084
        %1355 = vmatprep.subr.bf16.mxu0 0
        %1356 = vmatpush1.bf16.msra.mxu0 %v1085
        %1357 = vmatprep.subr.bf16.mxu0 0
        %1358 = vmatpush1.bf16.msra.mxu0 %v1086
        %1359 = vmatprep.mubr.bf16.mxu0 %v482
        %1360 = vmatmul.mubr.bf16.gmra.mrb[0].mxu0 %v468
        %v1361 = vpop.f32.mrb[0].mxu0
        %v1362 = vadd.f32 0.0, %v1361
        %v1363 = vpop.f32.mrb[0].mxu0
        %v1364 = vpop.f32.mrb[0].mxu0
        %v1365 = vpop.f32.mrb[0].mxu0
        %1366 = vdwg.mxu0
        %1367 = vmatprep.subr.bf16.mxu0 0
        %1368 = vmatpush1.bf16.msra.mxu0 %v1087
        %1369 = vmatprep.subr.bf16.mxu0 0
        %1370 = vmatpush1.bf16.msra.mxu0 %v1088
        %1371 = vmatprep.subr.bf16.mxu0 0
        %1372 = vmatpush1.bf16.msra.mxu0 %v1089
        %1373 = vmatprep.subr.bf16.mxu0 0
        %1374 = vmatpush1.bf16.msra.mxu0 %v1090
        %1375 = vmatprep.subr.bf16.mxu0 0
        %1376 = vmatpush1.bf16.msra.mxu0 %v1091
        %1377 = vmatprep.subr.bf16.mxu0 0
        %1378 = vmatpush1.bf16.msra.mxu0 %v1092
        %1379 = vmatprep.subr.bf16.mxu0 0
        %1380 = vmatpush1.bf16.msra.mxu0 %v1093
        %1381 = vmatprep.subr.bf16.mxu0 0
        %1382 = vmatpush1.bf16.msra.mxu0 %v1094
        %1383 = vmatprep.subr.bf16.mxu0 0
        %1384 = vmatpush1.bf16.msra.mxu0 %v1095
        %1385 = vmatprep.subr.bf16.mxu0 0
        %1386 = vmatpush1.bf16.msra.mxu0 %v1096
        %1387 = vmatprep.subr.bf16.mxu0 0
        %1388 = vmatpush1.bf16.msra.mxu0 %v1097
        %1389 = vmatprep.subr.bf16.mxu0 0
        %1390 = vmatpush1.bf16.msra.mxu0 %v1098
        %1391 = vmatprep.subr.bf16.mxu0 0
        %1392 = vmatpush1.bf16.msra.mxu0 %v1099
        %1393 = vmatprep.subr.bf16.mxu0 0
        %1394 = vmatpush1.bf16.msra.mxu0 %v1100
        %1395 = vmatprep.subr.bf16.mxu0 0
        %1396 = vmatpush1.bf16.msra.mxu0 %v1101
        %1397 = vmatprep.subr.bf16.mxu0 0
        %1398 = vmatpush1.bf16.msra.mxu0 %v1102
        %1399 = vmatprep.mubr.bf16.mxu0 %v492
        %1400 = vmatmul.mubr.bf16.gmra.mrb[0].mxu0 %v490
        %v1401 = vpop.f32.mrb[0].mxu0
        %v1402 = vadd.f32 %v1362, %v1401
        %v1403 = vpop.f32.mrb[0].mxu0
        %v1404 = vpop.f32.mrb[0].mxu0
        %v1405 = vpop.f32.mrb[0].mxu0
        %1406 = vdwg.mxu0
        %1407 = vmatprep.subr.bf16.mxu0 0
        %1408 = vmatpush1.bf16.msra.mxu0 %v1103
        %1409 = vmatprep.subr.bf16.mxu0 0
        %1410 = vmatpush1.bf16.msra.mxu0 %v1104
        %1411 = vmatprep.subr.bf16.mxu0 0
        %1412 = vmatpush1.bf16.msra.mxu0 %v1105
        %1413 = vmatprep.subr.bf16.mxu0 0
        %1414 = vmatpush1.bf16.msra.mxu0 %v1106
        %1415 = vmatprep.subr.bf16.mxu0 0
        %1416 = vmatpush1.bf16.msra.mxu0 %v1107
        %1417 = vmatprep.subr.bf16.mxu0 0
        %1418 = vmatpush1.bf16.msra.mxu0 %v1108
        %1419 = vmatprep.subr.bf16.mxu0 0
        %1420 = vmatpush1.bf16.msra.mxu0 %v1109
        %1421 = vmatprep.subr.bf16.mxu0 0
        %1422 = vmatpush1.bf16.msra.mxu0 %v1110
        %1423 = vmatprep.subr.bf16.mxu0 0
        %1424 = vmatpush1.bf16.msra.mxu0 %v1111
        %1425 = vmatprep.subr.bf16.mxu0 0
        %1426 = vmatpush1.bf16.msra.mxu0 %v1112
        %1427 = vmatprep.subr.bf16.mxu0 0
        %1428 = vmatpush1.bf16.msra.mxu0 %v1113
        %1429 = vmatprep.subr.bf16.mxu0 0
        %1430 = vmatpush1.bf16.msra.mxu0 %v1114
        %1431 = vmatprep.subr.bf16.mxu0 0
        %1432 = vmatpush1.bf16.msra.mxu0 %v1115
        %1433 = vmatprep.subr.bf16.mxu0 0
        %1434 = vmatpush1.bf16.msra.mxu0 %v1116
        %1435 = vmatprep.subr.bf16.mxu0 0
        %1436 = vmatpush1.bf16.msra.mxu0 %v1117
        %1437 = vmatprep.subr.bf16.mxu0 0
        %1438 = vmatpush1.bf16.msra.mxu0 %v1118
        %1439 = vmatprep.mubr.bf16.mxu0 %v489
        %1440 = vmatmul.mubr.bf16.gmra.mrb[0].mxu0 %v475
        %v1441 = vpop.f32.mrb[0].mxu0
        %v1442 = vadd.f32 %v1402, %v1441
        %v1443 = vpop.f32.mrb[0].mxu0
        %v1444 = vpop.f32.mrb[0].mxu0
        %v1445 = vpop.f32.mrb[0].mxu0
        %1446 = vdwg.mxu0
        %1447 = vmatprep.subr.bf16.mxu0 0
        %1448 = vmatpush1.bf16.msra.mxu0 %v1119
        %1449 = vmatprep.subr.bf16.mxu0 0
        %1450 = vmatpush1.bf16.msra.mxu0 %v1120
        %1451 = vmatprep.subr.bf16.mxu0 0
        %1452 = vmatpush1.bf16.msra.mxu0 %v1121
        %1453 = vmatprep.subr.bf16.mxu0 0
        %1454 = vmatpush1.bf16.msra.mxu0 %v1122
        %1455 = vmatprep.subr.bf16.mxu0 0
        %1456 = vmatpush1.bf16.msra.mxu0 %v1123
        %1457 = vmatprep.subr.bf16.mxu0 0
        %1458 = vmatpush1.bf16.msra.mxu0 %v1124
        %1459 = vmatprep.subr.bf16.mxu0 0
        %1460 = vmatpush1.bf16.msra.mxu0 %v1125
        %1461 = vmatprep.subr.bf16.mxu0 0
        %1462 = vmatpush1.bf16.msra.mxu0 %v1126
        %1463 = vmatprep.subr.bf16.mxu0 0
        %1464 = vmatpush1.bf16.msra.mxu0 %v1127
        %1465 = vmatprep.subr.bf16.mxu0 0
        %1466 = vmatpush1.bf16.msra.mxu0 %v1128
        %1467 = vmatprep.subr.bf16.mxu0 0
        %1468 = vmatpush1.bf16.msra.mxu0 %v1129
        %1469 = vmatprep.subr.bf16.mxu0 0
        %1470 = vmatpush1.bf16.msra.mxu0 %v1130
        %1471 = vmatprep.subr.bf16.mxu0 0
        %1472 = vmatpush1.bf16.msra.mxu0 %v1131
        %1473 = vmatprep.subr.bf16.mxu0 0
        %1474 = vmatpush1.bf16.msra.mxu0 %v1132
        %1475 = vmatprep.subr.bf16.mxu0 0
        %1476 = vmatpush1.bf16.msra.mxu0 %v1133
        %1477 = vmatprep.subr.bf16.mxu0 0
        %1478 = vmatpush1.bf16.msra.mxu0 %v1134
        %1479 = vmatprep.mubr.bf16.mxu0 %v493
        %1480 = vmatmul.mubr.bf16.gmra.mrb[0].mxu0 %v491
        %v1481 = vpop.f32.mrb[0].mxu0
        %v1482 = vadd.f32 %v1442, %v1481
        %v1483 = vpop.f32.mrb[0].mxu0
        %v1484 = vpop.f32.mrb[0].mxu0
        %v1485 = vpop.f32.mrb[0].mxu0
        %1486 = vdwg.mxu0
        %1487 = vmatprep.subr.bf16.mxu0 0
        %1488 = vmatpush1.bf16.msra.mxu0 %v1135
        %1489 = vmatprep.subr.bf16.mxu0 0
        %1490 = vmatpush1.bf16.msra.mxu0 %v1136
        %1491 = vmatprep.subr.bf16.mxu0 0
        %1492 = vmatpush1.bf16.msra.mxu0 %v1137
        %1493 = vmatprep.subr.bf16.mxu0 0
        %1494 = vmatpush1.bf16.msra.mxu0 %v1138
        %1495 = vmatprep.subr.bf16.mxu0 0
        %1496 = vmatpush1.bf16.msra.mxu0 %v1139
        %1497 = vmatprep.subr.bf16.mxu0 0
        %1498 = vmatpush1.bf16.msra.mxu0 %v1140
        %1499 = vmatprep.subr.bf16.mxu0 0
        %1500 = vmatpush1.bf16.msra.mxu0 %v1141
        %1501 = vmatprep.subr.bf16.mxu0 0
        %1502 = vmatpush1.bf16.msra.mxu0 %v1142
        %1503 = vmatprep.subr.bf16.mxu0 0
        %1504 = vmatpush1.bf16.msra.mxu0 %v1143
        %1505 = vmatprep.subr.bf16.mxu0 0
        %1506 = vmatpush1.bf16.msra.mxu0 %v1144
        %1507 = vmatprep.subr.bf16.mxu0 0
        %1508 = vmatpush1.bf16.msra.mxu0 %v1145
        %1509 = vmatprep.subr.bf16.mxu0 0
        %1510 = vmatpush1.bf16.msra.mxu0 %v1146
        %1511 = vmatprep.subr.bf16.mxu0 0
        %1512 = vmatpush1.bf16.msra.mxu0 %v1147
        %1513 = vmatprep.subr.bf16.mxu0 0
        %1514 = vmatpush1.bf16.msra.mxu0 %v1148
        %1515 = vmatprep.subr.bf16.mxu0 0
        %1516 = vmatpush1.bf16.msra.mxu0 %v1149
        %1517 = vmatprep.subr.bf16.mxu0 0
        %1518 = vmatpush1.bf16.msra.mxu0 %v1150
        %1519 = vmatprep.mubr.bf16.mxu0 %v531
        %1520 = vmatmul.mubr.bf16.gmra.mrb[0].mxu0 %v517
        %v1521 = vpop.f32.mrb[0].mxu0
        %v1522 = vadd.f32 %v1482, %v1521
        %v1523 = vpop.f32.mrb[0].mxu0
        %v1524 = vpop.f32.mrb[0].mxu0
        %v1525 = vpop.f32.mrb[0].mxu0
        %1526 = vdwg.mxu0
        %1527 = vmatprep.subr.bf16.mxu0 0
        %1528 = vmatpush1.bf16.msra.mxu0 %v1151
        %1529 = vmatprep.subr.bf16.mxu0 0
        %1530 = vmatpush1.bf16.msra.mxu0 %v1152
        %1531 = vmatprep.subr.bf16.mxu0 0
        %1532 = vmatpush1.bf16.msra.mxu0 %v1153
        %1533 = vmatprep.subr.bf16.mxu0 0
        %1534 = vmatpush1.bf16.msra.mxu0 %v1154
        %1535 = vmatprep.subr.bf16.mxu0 0
        %1536 = vmatpush1.bf16.msra.mxu0 %v1155
        %1537 = vmatprep.subr.bf16.mxu0 0
        %1538 = vmatpush1.bf16.msra.mxu0 %v1156
        %1539 = vmatprep.subr.bf16.mxu0 0
        %1540 = vmatpush1.bf16.msra.mxu0 %v1157
        %1541 = vmatprep.subr.bf16.mxu0 0
        %1542 = vmatpush1.bf16.msra.mxu0 %v1158
        %1543 = vmatprep.subr.bf16.mxu0 0
        %1544 = vmatpush1.bf16.msra.mxu0 %v1159
        %1545 = vmatprep.subr.bf16.mxu0 0
        %1546 = vmatpush1.bf16.msra.mxu0 %v1160
        %1547 = vmatprep.subr.bf16.mxu0 0
        %1548 = vmatpush1.bf16.msra.mxu0 %v1161
        %1549 = vmatprep.subr.bf16.mxu0 0
        %1550 = vmatpush1.bf16.msra.mxu0 %v1162
        %1551 = vmatprep.subr.bf16.mxu0 0
        %1552 = vmatpush1.bf16.msra.mxu0 %v1163
        %1553 = vmatprep.subr.bf16.mxu0 0
        %1554 = vmatpush1.bf16.msra.mxu0 %v1164
        %1555 = vmatprep.subr.bf16.mxu0 0
        %1556 = vmatpush1.bf16.msra.mxu0 %v1165
        %1557 = vmatprep.subr.bf16.mxu0 0
        %1558 = vmatpush1.bf16.msra.mxu0 %v1166
        %1559 = vmatprep.mubr.bf16.mxu0 %v541
        %1560 = vmatmul.mubr.bf16.gmra.mrb[0].mxu0 %v539
        %v1561 = vpop.f32.mrb[0].mxu0
        %v1562 = vadd.f32 %v1522, %v1561
        %v1563 = vpop.f32.mrb[0].mxu0
        %v1564 = vpop.f32.mrb[0].mxu0
        %v1565 = vpop.f32.mrb[0].mxu0
        %1566 = vdwg.mxu0
        %1567 = vmatprep.subr.bf16.mxu0 0
        %1568 = vmatpush1.bf16.msra.mxu0 %v1167
        %1569 = vmatprep.subr.bf16.mxu0 0
        %1570 = vmatpush1.bf16.msra.mxu0 %v1168
        %1571 = vmatprep.subr.bf16.mxu0 0
        %1572 = vmatpush1.bf16.msra.mxu0 %v1169
        %1573 = vmatprep.subr.bf16.mxu0 0
        %1574 = vmatpush1.bf16.msra.mxu0 %v1170
        %1575 = vmatprep.subr.bf16.mxu0 0
        %1576 = vmatpush1.bf16.msra.mxu0 %v1171
        %1577 = vmatprep.subr.bf16.mxu0 0
        %1578 = vmatpush1.bf16.msra.mxu0 %v1172
        %1579 = vmatprep.subr.bf16.mxu0 0
        %1580 = vmatpush1.bf16.msra.mxu0 %v1173
        %1581 = vmatprep.subr.bf16.mxu0 0
        %1582 = vmatpush1.bf16.msra.mxu0 %v1174
        %1583 = vmatprep.subr.bf16.mxu0 0
        %1584 = vmatpush1.bf16.msra.mxu0 %v1175
        %1585 = vmatprep.subr.bf16.mxu0 0
        %1586 = vmatpush1.bf16.msra.mxu0 %v1176
        %1587 = vmatprep.subr.bf16.mxu0 0
        %1588 = vmatpush1.bf16.msra.mxu0 %v1177
        %1589 = vmatprep.subr.bf16.mxu0 0
        %1590 = vmatpush1.bf16.msra.mxu0 %v1178
        %1591 = vmatprep.subr.bf16.mxu0 0
        %1592 = vmatpush1.bf16.msra.mxu0 %v1179
        %1593 = vmatprep.subr.bf16.mxu0 0
        %1594 = vmatpush1.bf16.msra.mxu0 %v1180
        %1595 = vmatprep.subr.bf16.mxu0 0
        %1596 = vmatpush1.bf16.msra.mxu0 %v1181
        %1597 = vmatprep.subr.bf16.mxu0 0
        %1598 = vmatpush1.bf16.msra.mxu0 %v1182
        %1599 = vmatprep.mubr.bf16.mxu0 %v538
        %1600 = vmatmul.mubr.bf16.gmra.mrb[0].mxu0 %v524
        %v1601 = vpop.f32.mrb[0].mxu0
        %v1602 = vadd.f32 %v1562, %v1601
        %v1603 = vpop.f32.mrb[0].mxu0
        %v1604 = vpop.f32.mrb[0].mxu0
        %v1605 = vpop.f32.mrb[0].mxu0
        %1606 = vdwg.mxu0
        %1607 = vmatprep.subr.bf16.mxu0 0
        %1608 = vmatpush1.bf16.msra.mxu0 %v1183
        %1609 = vmatprep.subr.bf16.mxu0 0
        %1610 = vmatpush1.bf16.msra.mxu0 %v1184
        %1611 = vmatprep.subr.bf16.mxu0 0
        %1612 = vmatpush1.bf16.msra.mxu0 %v1185
        %1613 = vmatprep.subr.bf16.mxu0 0
        %1614 = vmatpush1.bf16.msra.mxu0 %v1186
        %1615 = vmatprep.subr.bf16.mxu0 0
        %1616 = vmatpush1.bf16.msra.mxu0 %v1187
        %1617 = vmatprep.subr.bf16.mxu0 0
        %1618 = vmatpush1.bf16.msra.mxu0 %v1188
        %1619 = vmatprep.subr.bf16.mxu0 0
        %1620 = vmatpush1.bf16.msra.mxu0 %v1189
        %1621 = vmatprep.subr.bf16.mxu0 0
        %1622 = vmatpush1.bf16.msra.mxu0 %v1190
        %1623 = vmatprep.subr.bf16.mxu0 0
        %1624 = vmatpush1.bf16.msra.mxu0 %v1191
        %1625 = vmatprep.subr.bf16.mxu0 0
        %1626 = vmatpush1.bf16.msra.mxu0 %v1192
        %1627 = vmatprep.subr.bf16.mxu0 0
        %1628 = vmatpush1.bf16.msra.mxu0 %v1193
        %1629 = vmatprep.subr.bf16.mxu0 0
        %1630 = vmatpush1.bf16.msra.mxu0 %v1194
        %1631 = vmatprep.subr.bf16.mxu0 0
        %1632 = vmatpush1.bf16.msra.mxu0 %v1195
        %1633 = vmatprep.subr.bf16.mxu0 0
        %1634 = vmatpush1.bf16.msra.mxu0 %v1196
        %1635 = vmatprep.subr.bf16.mxu0 0
        %1636 = vmatpush1.bf16.msra.mxu0 %v1197
        %1637 = vmatprep.subr.bf16.mxu0 0
        %1638 = vmatpush1.bf16.msra.mxu0 %v1198
        %1639 = vmatprep.mubr.bf16.mxu0 %v542
        %1640 = vmatmul.mubr.bf16.gmra.mrb[0].mxu0 %v540
        %v1641 = vpop.f32.mrb[0].mxu0
        %v1642 = vadd.f32 %v1602, %v1641
        %v1643 = vpop.f32.mrb[0].mxu0
        %v1644 = vpop.f32.mrb[0].mxu0
        %v1645 = vpop.f32.mrb[0].mxu0
        %1646 = vdwg.mxu0
        %v1647 = vadd.f32 %v184, %v1642
        %1648 = vst [vmem:[#allocation2] sm:$0x3] %v1647
        %p1649 = scmp.eq.s32.totalorder %s15, 1
        // Predicated region
        $region37: #{arcface_forward.3} parent=31 // pred_check
          %p1650 = pneg %p1649
        $region38: #{arcface_forward.3} parent=31 // pred_check_branch
          %1652 = sbr.rel (%p1650) target = $region40
        $region39: #{arcface_forward.3} parent=31 // pred_region
          %v1653 = vld [vmem:[#allocation2] sm:$0x3]
          %v1654 = vld [vmem:[%s2] sm:$0x1]
          %v1656 = vlaneseq
          %v1657 = vshrl.u32 %v1656, 7
          %v1658 = vsub.s32 0, %v1657
          %v1659 = vrot.slane %v1654, %v1658
          %v1661 = vadd.f32 %v1653, %v1659
          %v1662 = vmul.f32 %v1661, %v1661
          %vm1663 = vcmask 1041408
          %v1664 = vsel %vm1663, %v1662, 0.0
          %1665 = vadd.xlane.f32.xlu0 %v1664
          %v1666 = vpop.xlane.xlu0 %1665
          %v1667 = vmax.f32 %v1666, 1e-24
          %v1668 = vrsqrt.pop %v1667
          %v1669 = vmul.f32 %v1661, %v1668
          %1670 = vst [vmem:[#allocation3] sm:$0x3] %v1669
        $region40: #{arcface_forward.3} parent=31 // pred_fallthru
          _
        // Predicated region
        $region41: #{arcface_forward.3} parent=31 // pred_check
          %p1671 = pneg %p101
        $region42: #{arcface_forward.3} parent=31 // pred_check_branch
          %1673 = sbr.rel (%p1671) target = $region44
        $region43: #{arcface_forward.3} parent=31 // pred_region
          %s1675 = ssub.s32 32, 32
          %1676 = vsyncadd [#allocation4], %s1675
          %s1678 = sshll.u32 [#allocation3], 4
          %s1679 = int_to_ptr.vmem [resolvable:$true] %s1678
          %1681 = dma.vmem_to_hbm [thread:$0]  %s1679, 32, %s3, [#allocation4]
        $region44: #{arcface_forward.3} parent=31 // pred_fallthru
          _
        // Predicated region
        $region45: #{arcface_forward.3} parent=31 // pred_check
          %p1682 = pneg %p101
        $region46: #{arcface_forward.3} parent=31 // pred_check_branch
          %1684 = sbr.rel (%p1682) target = $region48
        $region47: #{arcface_forward.3} parent=31 // pred_region
          %1685 = dma.done [#allocation4], 32
        $region48: #{arcface_forward.3} parent=31 // pred_fallthru
          _
      $region32: #{arcface_forward.3} parent=5 // pred_fallthru
        _
      %p1686 = scmp.le.s32.totalorder 2, %s10
      // Predicated region
      $region49: #{arcface_forward.3} parent=5 // pred_check
        %p1687 = pneg %p1686
      $region50: #{arcface_forward.3} parent=5 // pred_check_branch
        %1689 = sbr.rel (%p1687) target = $region52
      $region51: #{arcface_forward.3} parent=5 // pred_region
        %s1690 = ssub.s32 %s10, 2
      $region52: #{arcface_forward.3} parent=5 // pred_fallthru
        _
    $region6: #{arcface_forward.3} parent=1 // loop_footer
      %s14 = sadd.s32 1, %s10
    $region7: #{arcface_forward.3} parent=1 // loop_footer_branch
      %9 = sbr.rel target = $region3
    $region8: #{arcface_forward.3} parent=1 // loop_exit
      _
    %1691 = vsyncpa [#allocation4], 1
    %s1692 = scalar_lea.sflag [#allocation4], 1
    %1693 = vsyncpa %s1692, 1

</llo_original>
